<compile_context>
chip_gen: v7x
topology: tpu7x:2x2x1
jax: 0.10.0
libtpu: 0.0.40
codegen_flags: <defaults>
</compile_context>

<pallas_src>
import functools

import jax
import jax.numpy as jnp
from jax.experimental import pallas as pl
from jax.experimental.pallas import tpu as pltpu


def _round_up(x, m):
    return (x + m - 1) // m * m


# ----------------------------- Pallas kernel --------------------------------

def _conv_block_kernel(p_ref, w1_ref, b1_ref, w2_ref, b2_ref, o_ref, y1h_ref,
                       *, H, W):
    """Fused (conv3x3 + folded-BN + ReLU) x2 for one image.

    p_ref  : (1, H*W, 9*C1)    bf16  im2col patches of the input image
    w1_ref : (9*C1, C2p)       bf16  stage-1 weights, BN1 scale folded in
    b1_ref : (1, C2p)          f32   stage-1 folded bias (conv bias + BN1)
    w2_ref : (9*C2p, C2p)      bf16  stage-2 weights, BN2 scale folded in
    b2_ref : (1, C2p)          f32   stage-2 folded bias
    o_ref  : (1, H*W, C2p)     bf16  output
    y1h_ref: (H+2, W+2, C2p)   bf16  VMEM scratch: stage-1 result with halo
    """
    C2p = o_ref.shape[-1]
    HW = H * W

    # ---- stage 1: all 9 taps folded into K -> one MXU matmul ----
    acc1 = jnp.dot(p_ref[0], w1_ref[...], preferred_element_type=jnp.float32)
    y1 = jnp.maximum(acc1 + b1_ref[...], 0.0)                  # (H*W, C2p) f32

    # ---- stage-1 -> stage-2 handoff stays in VMEM (zero border + centre) ----
    y1h_ref[...] = jnp.zeros_like(y1h_ref)
    y1h_ref[1:H + 1, 1:W + 1, :] = y1.reshape(H, W, C2p).astype(y1h_ref.dtype)

    # ---- stage 2: hoist the width (dx) shift once ----
    # y1c[h, w, dx*C2p + c] == y1h[h, w+dx, c]; the only sublane-shifted
    # slices happen here (3 of them) instead of 9 per-tap relayout copies.
    y1c = jnp.concatenate([y1h_ref[:, dx:dx + W, :] for dx in range(3)],
                          axis=-1)                             # (H+2, W, 3*C2p)
    # dy slices are along the major axis -> free base-offset changes.
    patch2 = jnp.concatenate([y1c[dy:dy + H] for dy in range(3)],
                             axis=-1)                          # (H, W, 9*C2p)
    acc2 = jnp.dot(patch2.reshape(HW, 9 * C2p), w2_ref[...],
                   preferred_element_type=jnp.float32)
    o_ref[0] = jnp.maximum(acc2 + b2_ref[...], 0.0).astype(o_ref.dtype)


def _fused_conv_block(patches, w1, b1, w2, b2, *, H, W):
    """patches: (N, H*W, 9*C1) bf16; w1: (9*C1, C2p); w2: (9*C2p, C2p) bf16;
    b1/b2: (1, C2p) f32  ->  (N, H*W, C2p) bf16 (both stages fused)."""
    N, HW, K1 = patches.shape
    K2, C2p = w2.shape

    flops = 2 * N * HW * (K1 + K2) * C2p
    bytes_accessed = ((patches.size + w1.size + w2.size + N * HW * C2p) * 2
                      + (b1.size + b2.size) * 4)

    kernel = functools.partial(_conv_block_kernel, H=H, W=W)
    return pl.pallas_call(
        kernel,
        out_shape=jax.ShapeDtypeStruct((N, HW, C2p), jnp.bfloat16),
        grid_spec=pltpu.PrefetchScalarGridSpec(
            num_scalar_prefetch=0,
            grid=(N,),
            in_specs=[
                pl.BlockSpec((1, HW, K1), lambda n: (n, 0, 0)),
                # Constant index_maps: weights / biases are DMA'd once and
                # stay resident across the whole batch.
                pl.BlockSpec((K1, C2p), lambda n: (0, 0)),
                pl.BlockSpec((1, C2p), lambda n: (0, 0)),
                pl.BlockSpec((K2, C2p), lambda n: (0, 0)),
                pl.BlockSpec((1, C2p), lambda n: (0, 0)),
            ],
            out_specs=pl.BlockSpec((1, HW, C2p), lambda n: (n, 0, 0)),
            scratch_shapes=[pltpu.VMEM((H + 2, W + 2, C2p), jnp.bfloat16)],
        ),
        compiler_params=pltpu.CompilerParams(
            dimension_semantics=("parallel",),
            # Actual per-step footprint is well under 1 MiB at demo sizes;
            # 32 MiB fits the scoped-VMEM budget of v5e/v6e (128 MiB physical)
            # and v7x (64 MiB physical).
            vmem_limit_bytes=32 * 1024 * 1024,
        ),
        cost_estimate=pl.CostEstimate(
            flops=flops, transcendentals=0, bytes_accessed=bytes_accessed),
    )(patches, w1, b1, w2, b2)


# ------------------------------- JAX glue ------------------------------------

def _fold_conv_bn(w_oihw, conv_bias, bn, *, cin_pad_to, cout_pad_to, eps=1e-5):
    """Fold inference BatchNorm into the conv.

    Returns (w_mat, bias): w_mat is (9*cin_pad_to, cout_pad_to) bf16 with the
    BN scale folded into the output-channel columns, rows ordered (dy, dx, c);
    bias is (1, cout_pad_to) f32 = beta + (conv_bias - running_mean) * scale.
    """
    gamma, beta, rmean, rvar = bn
    cout, cin, kh, kw = w_oihw.shape
    scale = gamma / jnp.sqrt(rvar + eps)                      # (Cout,)
    bias = beta + (conv_bias - rmean) * scale                 # (Cout,)
    w = jnp.transpose(w_oihw, (2, 3, 1, 0)) * scale           # (3, 3, Cin, Cout)
    w = jnp.pad(w, ((0, 0), (0, 0),
                    (0, cin_pad_to - cin), (0, cout_pad_to - cout)))
    w_mat = w.reshape(kh * kw * cin_pad_to, cout_pad_to).astype(jnp.bfloat16)
    bias_p = jnp.pad(bias, (0, cout_pad_to - cout))[None, :].astype(jnp.float32)
    return w_mat, bias_p


@jax.jit
def conv_block_forward(x_nchw, params):
    """ConvBlock forward (inference-mode BN). Input NCHW, output NCHW f32."""
    N, C, H, W = x_nchw.shape
    cout = params["w1"].shape[0]
    c2p = _round_up(cout, 8)   # channel width of the fused intermediate/output

    # NCHW -> NHWC, cast to bf16 *before* padding (halves pad-fusion bytes),
    # then 1-pixel halo + im2col: all 9 taps folded into K (small channels).
    x = jnp.transpose(x_nchw, (0, 2, 3, 1)).astype(jnp.bfloat16)
    xh = jnp.pad(x, ((0, 0), (1, 1), (1, 1), (0, 0)))          # (N, H+2, W+2, C)
    patches = jnp.concatenate(
        [xh[:, dy:dy + H, dx:dx + W, :] for dy in range(3) for dx in range(3)],
        axis=-1).reshape(N, H * W, 9 * C)                      # (N, H*W, 9*C)

    w1, b1 = _fold_conv_bn(params["w1"], params["b1"], params["bn1"],
                           cin_pad_to=C, cout_pad_to=c2p)
    w2, b2 = _fold_conv_bn(params["w2"], params["b2"], params["bn2"],
                           cin_pad_to=c2p, cout_pad_to=c2p)

    y = _fused_conv_block(patches, w1, b1, w2, b2, H=H, W=W)   # (N, H*W, c2p)
    y = y.reshape(N, H, W, c2p)[:, :, :, :cout]
    return jnp.transpose(y, (0, 3, 1, 2)).astype(jnp.float32)  # back to NCHW


# --------------------------- parameters / reference --------------------------

def _make_params(key, in_channels, out_channels):
    """Deterministic synthetic parameters mirroring ConvBlock.__init__ shapes."""
    ks = jax.random.split(key, 10)

    def conv_params(k1, k2, cin, cout):
        w = 0.1 * jax.random.normal(k1, (cout, cin, 3, 3), jnp.float32)
        b = 0.1 * jax.random.normal(k2, (cout,), jnp.float32)
        return w, b

    def bn_params(k1, k2, c):
        gamma = 1.0 + 0.1 * jax.random.normal(k1, (c,), jnp.float32)
        beta = 0.1 * jax.random.normal(k2, (c,), jnp.float32)
        rmean = 0.05 * jax.random.normal(jax.random.fold_in(k1, 7), (c,), jnp.float32)
        rvar = 1.0 + 0.1 * jnp.abs(
            jax.random.normal(jax.random.fold_in(k2, 7), (c,), jnp.float32))
        return gamma, beta, rmean, rvar

    w1, b1 = conv_params(ks[0], ks[1], in_channels, out_channels)
    g1, be1, m1, v1 = bn_params(ks[2], ks[3], out_channels)
    w2, b2 = conv_params(ks[4], ks[5], out_channels, out_channels)
    g2, be2, m2, v2 = bn_params(ks[6], ks[7], out_channels)
    return dict(w1=w1, b1=b1, bn1=(g1, be1, m1, v1),
                w2=w2, b2=b2, bn2=(g2, be2, m2, v2))


def _reference_forward(x_nchw, params, eps=1e-5):
    """Pure-JAX f32 reference (lax conv + explicit inference BN)."""
    def stage(x, w, b, bn):
        gamma, beta, rmean, rvar = bn
        y = jax.lax.conv_general_dilated(
            x, w, window_strides=(1, 1), padding="SAME",
            dimension_numbers=("NCHW", "OIHW", "NCHW"))
        y = y + b[None, :, None, None]
        y = (y - rmean[None, :, None, None]) * (
            gamma[None, :, None, None] / jnp.sqrt(rvar[None, :, None, None] + eps))
        y = y + beta[None, :, None, None]
        return jnp.maximum(y, 0.0)

    y = stage(x_nchw, params["w1"], params["b1"], params["bn1"])
    y = stage(y, params["w2"], params["b2"], params["bn2"])
    return y


if __name__ == "__main__":
    key = jax.random.PRNGKey(0)
    k_x, k_p = jax.random.split(key)

    in_channels, out_channels = 4, 8
    N, H, W = 2, 16, 16

    x = jax.random.normal(k_x, (N, in_channels, H, W), jnp.float32)   # NCHW
    params = _make_params(k_p, in_channels, out_channels)

    out = conv_block_forward(x, params)
    out = jax.block_until_ready(out)

    assert out.shape == (N, out_channels, H, W), out.shape
    assert bool(jnp.all(jnp.isfinite(out)))
    assert bool(jnp.all(out >= 0.0))          # ReLU output is non-negative

    # Loose tolerance: kernel uses bf16 activations/weights with f32 accumulate.
    ref = _reference_forward(x, params)
    max_err = float(jnp.max(jnp.abs(out - ref)))
    assert max_err < 0.1, f"max abs error vs reference: {max_err}"

    print("KERNEL_OK")
</pallas_src>

<mosaic_0001>
module attributes {stable_mosaic.version = 11 : i64} {
  func.func @_conv_block_kernel(%arg0: i32, %arg1: memref<1x256x36xbf16, #tpu.memory_space<vmem>>, %arg2: memref<36x8xbf16, #tpu.memory_space<vmem>>, %arg3: memref<1x8xf32, #tpu.memory_space<vmem>>, %arg4: memref<72x8xbf16, #tpu.memory_space<vmem>>, %arg5: memref<1x8xf32, #tpu.memory_space<vmem>>, %arg6: memref<1x256x8xbf16, #tpu.memory_space<vmem>>, %arg7: memref<18x18x8xbf16, #tpu.memory_space<vmem>>) attributes {dimension_semantics = [#tpu.dimension_semantics<parallel>], iteration_bounds = array<i64: 2>, scalar_prefetch = 0 : i64, scratch_operands = 1 : i64, tpu.core_type = #tpu.core_type<tc>, window_params = [{transform_indices = @transform_0, window_bounds = array<i64: 1, 256, 36>}, {pipeline_mode = #tpu.pipeline_mode<synchronous>, transform_indices = @transform_1, window_bounds = array<i64: 36, 8>}, {pipeline_mode = #tpu.pipeline_mode<synchronous>, transform_indices = @transform_2, window_bounds = array<i64: 1, 8>}, {pipeline_mode = #tpu.pipeline_mode<synchronous>, transform_indices = @transform_3, window_bounds = array<i64: 72, 8>}, {pipeline_mode = #tpu.pipeline_mode<synchronous>, transform_indices = @transform_4, window_bounds = array<i64: 1, 8>}, {transform_indices = @transform_5, window_bounds = array<i64: 1, 256, 8>}]} {
    %c0 = arith.constant 0 : index
    %c0_0 = arith.constant 0 : index
    %c0_1 = arith.constant 0 : index
    %0 = vector.load %arg1[%c0, %c0_0, %c0_1] : memref<1x256x36xbf16, #tpu.memory_space<vmem>>, vector<1x256x36xbf16>
    %1 = vector.shape_cast %0 : vector<1x256x36xbf16> to vector<256x36xbf16>
    %c0_2 = arith.constant 0 : index
    %c0_3 = arith.constant 0 : index
    %2 = vector.load %arg2[%c0_2, %c0_3] : memref<36x8xbf16, #tpu.memory_space<vmem>>, vector<36x8xbf16>
    %cst = arith.constant dense<0.000000e+00> : vector<256x8xf32>
    %3 = tpu.matmul %1, %2, %cst {dimension_numbers = #tpu.dot_dimension_numbers<[1], [0], [0], [1], [0, 0, 1, 1], [], []>} : vector<256x36xbf16>, vector<36x8xbf16>, vector<256x8xf32> -> vector<256x8xf32>
    %c0_4 = arith.constant 0 : index
    %c0_5 = arith.constant 0 : index
    %4 = vector.load %arg3[%c0_4, %c0_5] : memref<1x8xf32, #tpu.memory_space<vmem>>, vector<1x8xf32>
    %5 = vector.broadcast %4 : vector<1x8xf32> to vector<256x8xf32>
    %6 = arith.addf %3, %5 : vector<256x8xf32>
    %cst_6 = arith.constant 0.000000e+00 : f32
    %7 = vector.broadcast %cst_6 : f32 to vector<256x8xf32>
    %8 = arith.maximumf %6, %7 : vector<256x8xf32>
    %cst_7 = arith.constant 0.000000e+00 : bf16
    %9 = vector.broadcast %cst_7 : bf16 to vector<18x18x8xbf16>
    %c0_8 = arith.constant 0 : index
    %c0_9 = arith.constant 0 : index
    %c0_10 = arith.constant 0 : index
    %10 = vector.load %arg7[%c0_8, %c0_9, %c0_10] : memref<18x18x8xbf16, #tpu.memory_space<vmem>>, vector<18x18x8xbf16>
    tpu.vector_store %arg7[%c0_8, %c0_9, %c0_10], %9 {strides = array<i32>} : memref<18x18x8xbf16, #tpu.memory_space<vmem>>, vector<18x18x8xbf16>,
    %11 = vector.shape_cast %8 : vector<256x8xf32> to vector<16x16x8xf32>
    %12 = arith.truncf %11 : vector<16x16x8xf32> to vector<16x16x8xbf16>
    %c1 = arith.constant 1 : index
    %c1_11 = arith.constant 1 : index
    %c0_12 = arith.constant 0 : index
    %13 = vector.load %arg7[%c1, %c1_11, %c0_12] : memref<18x18x8xbf16, #tpu.memory_space<vmem>>, vector<16x16x8xbf16>
    tpu.vector_store %arg7[%c1, %c1_11, %c0_12], %12 {strides = array<i32>} : memref<18x18x8xbf16, #tpu.memory_space<vmem>>, vector<16x16x8xbf16>,
    %c0_13 = arith.constant 0 : index
    %c0_14 = arith.constant 0 : index
    %c0_15 = arith.constant 0 : index
    %14 = vector.load %arg7[%c0_13, %c0_14, %c0_15] : memref<18x18x8xbf16, #tpu.memory_space<vmem>>, vector<18x16x8xbf16>
    %c0_16 = arith.constant 0 : index
    %c1_17 = arith.constant 1 : index
    %c0_18 = arith.constant 0 : index
    %15 = vector.load %arg7[%c0_16, %c1_17, %c0_18] : memref<18x18x8xbf16, #tpu.memory_space<vmem>>, vector<18x16x8xbf16>
    %c0_19 = arith.constant 0 : index
    %c2 = arith.constant 2 : index
    %c0_20 = arith.constant 0 : index
    %16 = vector.load %arg7[%c0_19, %c2, %c0_20] : memref<18x18x8xbf16, #tpu.memory_space<vmem>>, vector<18x16x8xbf16>
    %17 = tpu.concatenate %14, %15, %16 in 2 : vector<18x16x8xbf16>, vector<18x16x8xbf16>, vector<18x16x8xbf16> -> vector<18x16x24xbf16>
    %18 = vector.extract_strided_slice %17 {offsets = [0, 0, 0], sizes = [16, 16, 24], strides = [1, 1, 1]} : vector<18x16x24xbf16> to vector<16x16x24xbf16>
    %19 = vector.extract_strided_slice %17 {offsets = [1, 0, 0], sizes = [16, 16, 24], strides = [1, 1, 1]} : vector<18x16x24xbf16> to vector<16x16x24xbf16>
    %20 = vector.extract_strided_slice %17 {offsets = [2, 0, 0], sizes = [16, 16, 24], strides = [1, 1, 1]} : vector<18x16x24xbf16> to vector<16x16x24xbf16>
    %21 = tpu.concatenate %18, %19, %20 in 2 : vector<16x16x24xbf16>, vector<16x16x24xbf16>, vector<16x16x24xbf16> -> vector<16x16x72xbf16>
    %22 = vector.shape_cast %21 : vector<16x16x72xbf16> to vector<256x72xbf16>
    %c0_21 = arith.constant 0 : index
    %c0_22 = arith.constant 0 : index
    %23 = vector.load %arg4[%c0_21, %c0_22] : memref<72x8xbf16, #tpu.memory_space<vmem>>, vector<72x8xbf16>
    %cst_23 = arith.constant dense<0.000000e+00> : vector<256x8xf32>
    %24 = tpu.matmul %22, %23, %cst_23 {dimension_numbers = #tpu.dot_dimension_numbers<[1], [0], [0], [1], [0, 0, 1, 1], [], []>} : vector<256x72xbf16>, vector<72x8xbf16>, vector<256x8xf32> -> vector<256x8xf32>
    %c0_24 = arith.constant 0 : index
    %c0_25 = arith.constant 0 : index
    %25 = vector.load %arg5[%c0_24, %c0_25] : memref<1x8xf32, #tpu.memory_space<vmem>>, vector<1x8xf32>
    %26 = vector.broadcast %25 : vector<1x8xf32> to vector<256x8xf32>
    %27 = arith.addf %24, %26 : vector<256x8xf32>
    %cst_26 = arith.constant 0.000000e+00 : f32
    %28 = vector.broadcast %cst_26 : f32 to vector<256x8xf32>
    %29 = arith.maximumf %27, %28 : vector<256x8xf32>
    %30 = arith.truncf %29 : vector<256x8xf32> to vector<256x8xbf16>
    %c0_27 = arith.constant 0 : index
    %c0_28 = arith.constant 0 : index
    %c0_29 = arith.constant 0 : index
    %31 = vector.load %arg6[%c0_27, %c0_28, %c0_29] : memref<1x256x8xbf16, #tpu.memory_space<vmem>>, vector<1x256x8xbf16>
    %32 = vector.shape_cast %31 : vector<1x256x8xbf16> to vector<256x8xbf16>
    %33 = vector.shape_cast %30 : vector<256x8xbf16> to vector<1x256x8xbf16>
    tpu.vector_store %arg6[%c0_27, %c0_28, %c0_29], %33 {strides = array<i32>} : memref<1x256x8xbf16, #tpu.memory_space<vmem>>, vector<1x256x8xbf16>,
    return
  }
  func.func @transform_0(%arg0: i32) -> (i32, i32, i32) {
    %c0_i32 = arith.constant 0 : i32
    %c0_i32_0 = arith.constant 0 : i32
    %c0_i32_1 = arith.constant 0 : i32
    return %arg0, %c0_i32, %c0_i32_0 : i32, i32, i32
  }
  func.func @transform_1(%arg0: i32) -> (i32, i32) {
    %c0_i32 = arith.constant 0 : i32
    %c0_i32_0 = arith.constant 0 : i32
    %c0_i32_1 = arith.constant 0 : i32
    return %c0_i32, %c0_i32_0 : i32, i32
  }
  func.func @transform_2(%arg0: i32) -> (i32, i32) {
    %c0_i32 = arith.constant 0 : i32
    %c0_i32_0 = arith.constant 0 : i32
    %c0_i32_1 = arith.constant 0 : i32
    return %c0_i32, %c0_i32_0 : i32, i32
  }
  func.func @transform_3(%arg0: i32) -> (i32, i32) {
    %c0_i32 = arith.constant 0 : i32
    %c0_i32_0 = arith.constant 0 : i32
    %c0_i32_1 = arith.constant 0 : i32
    return %c0_i32, %c0_i32_0 : i32, i32
  }
  func.func @transform_4(%arg0: i32) -> (i32, i32) {
    %c0_i32 = arith.constant 0 : i32
    %c0_i32_0 = arith.constant 0 : i32
    %c0_i32_1 = arith.constant 0 : i32
    return %c0_i32, %c0_i32_0 : i32, i32
  }
  func.func @transform_5(%arg0: i32) -> (i32, i32, i32) {
    %c0_i32 = arith.constant 0 : i32
    %c0_i32_0 = arith.constant 0 : i32
    %c0_i32_1 = arith.constant 0 : i32
    return %arg0, %c0_i32, %c0_i32_0 : i32, i32, i32
  }
}

</mosaic_0001>

<llo_original>
// kernel: conv_block_forward.1
$region0: #{conv_block_forward.1}
  #allocation0 [shape = 'u32[]', space=smem, size = 0x4, offset = 0x4, fixed_abs, tag = 'smem constant byte address 0x4 - core index']
  #allocation1 [shape = 'u32[144,128]{1,0:T(1,128)}', space=vmem, size = 0x12000, scoped, tag = 'internal scratch']
  #allocation2 [shape = 'bf16[18,18,8]{2,1,0:T(8,128)(2,1)}', space=vmem, size = 0x1b000, scoped, tag = 'scratch operand']
  %s0 = inlined_call_operand.vmem [shape: bf16[2,256,36], index: 0, kind: input, shape index: {}]
  %s1 = inlined_call_operand.vmem [shape: bf16[36,8], index: 1, kind: input, shape index: {}]
  %s2 = inlined_call_operand.vmem [shape: f32[1,8], index: 2, kind: input, shape index: {}]
  %s3 = inlined_call_operand.vmem [shape: bf16[72,8], index: 3, kind: input, shape index: {}]
  %s4 = inlined_call_operand.vmem [shape: f32[1,8], index: 4, kind: input, shape index: {}]
  %s5 = inlined_call_operand.vmem [shape: bf16[2,256,8], index: 5, kind: output, shape index: {}]
  %s6 = sld [smem:[#allocation0]]
  $region53: #{conv_block_forward.1} parent=0
    _
  %s8 = ssub.s32 1, %s6
  %s9 = scalar_select 0, %s8, %s6
  loop: start=0, step=1, limit=4
  $region2: #{conv_block_forward.1} parent=0 // loop_pre_header
    _
  $region3: #{conv_block_forward.1} parent=0 // loop_header
    %s11 = sphi 0, %s15
    %p12 = scmp.ge.s32.totalorder %s11, 4
    %s21 = sphi 0, %s23
    %s24 = sphi 0, %s21
    %s25 = sphi 0, %s24
    %s41 = sphi 0, %s25
    %s45 = sphi 0, %s45
    %s47 = sphi 0, %s45
    %s48 = sphi 0, %s47
    %s62 = sphi 0, %s48
    %s66 = sphi 0, %s66
    %s68 = sphi 0, %s66
    %s69 = sphi 0, %s68
    %s83 = sphi 0, %s69
    %s87 = sphi 0, %s87
    %s89 = sphi 0, %s87
    %s90 = sphi 0, %s89
    %s104 = sphi 0, %s90
    %s108 = sphi 0, %s108
    %s110 = sphi 0, %s108
    %s111 = sphi 0, %s110
    %s125 = sphi 0, %s111
    %s131 = sphi 0, %s133
    %s134 = sphi 0, %s131
    %s135 = sphi 0, %s134
    %s151 = sphi 0, %s135
  $region4: #{conv_block_forward.1} parent=0 // loop_header_branch
    %14 = sbr.rel (%p12) target = $region8
  $region5: #{conv_block_forward.1} parent=0 // loop_body
    %s16 = ssub.s32 %s11, 1
    %s17 = ssub.s32 %s11, 2
    %s18 = sadd.s32 %s11, 1
    %s19 = ssub.s32 %s11, %s18
    %p20 = scmp.eq.s32.totalorder %s19, 0
    %s22 = sadd.s32 %s21, 1
    %s23 = scalar_select %p20, %s21, %s22
    %p26 = pneg %p20
    %p27 = scmp.eq.s32.totalorder %s11, 1
    %p28 = por %p26, %p27
    %p29 = scmp.ne.s32.totalorder %s21, %s24
    %p30 = scmp.eq.s32.totalorder %s11, 0
    %p31 = por %p29, %p30
    %p32 = scmp.ne.s32.totalorder %s21, %s24
    %p33 = scmp.eq.s32.totalorder %s16, 1
    %p34 = por %p32, %p33
    %p35 = scmp.ne.s32.totalorder %s24, %s25
    %p36 = scmp.eq.s32.totalorder %s16, 0
    %p37 = por %p35, %p36
    %p38 = scmp.ne.s32.totalorder %s24, %s25
    %p39 = scmp.eq.s32.totalorder %s17, 1
    %p40 = por %p38, %p39
    %p42 = scmp.ne.s32.totalorder %s25, %s41
    %p43 = scmp.eq.s32.totalorder %s17, 0
    %p44 = por %p42, %p43
    %s46 = sadd.s32 %s45, 1
    %p49 = scmp.eq.s32.totalorder %s11, 1
    %p50 = scmp.ne.s32.totalorder %s45, %s47
    %p51 = scmp.eq.s32.totalorder %s11, 0
    %p52 = por %p50, %p51
    %p53 = scmp.ne.s32.totalorder %s45, %s47
    %p54 = scmp.eq.s32.totalorder %s16, 1
    %p55 = por %p53, %p54
    %p56 = scmp.ne.s32.totalorder %s47, %s48
    %p57 = scmp.eq.s32.totalorder %s16, 0
    %p58 = por %p56, %p57
    %p59 = scmp.ne.s32.totalorder %s47, %s48
    %p60 = scmp.eq.s32.totalorder %s17, 1
    %p61 = por %p59, %p60
    %p63 = scmp.ne.s32.totalorder %s48, %s62
    %p64 = scmp.eq.s32.totalorder %s17, 0
    %p65 = por %p63, %p64
    %s67 = sadd.s32 %s66, 1
    %p70 = scmp.eq.s32.totalorder %s11, 1
    %p71 = scmp.ne.s32.totalorder %s66, %s68
    %p72 = scmp.eq.s32.totalorder %s11, 0
    %p73 = por %p71, %p72
    %p74 = scmp.ne.s32.totalorder %s66, %s68
    %p75 = scmp.eq.s32.totalorder %s16, 1
    %p76 = por %p74, %p75
    %p77 = scmp.ne.s32.totalorder %s68, %s69
    %p78 = scmp.eq.s32.totalorder %s16, 0
    %p79 = por %p77, %p78
    %p80 = scmp.ne.s32.totalorder %s68, %s69
    %p81 = scmp.eq.s32.totalorder %s17, 1
    %p82 = por %p80, %p81
    %p84 = scmp.ne.s32.totalorder %s69, %s83
    %p85 = scmp.eq.s32.totalorder %s17, 0
    %p86 = por %p84, %p85
    %s88 = sadd.s32 %s87, 1
    %p91 = scmp.eq.s32.totalorder %s11, 1
    %p92 = scmp.ne.s32.totalorder %s87, %s89
    %p93 = scmp.eq.s32.totalorder %s11, 0
    %p94 = por %p92, %p93
    %p95 = scmp.ne.s32.totalorder %s87, %s89
    %p96 = scmp.eq.s32.totalorder %s16, 1
    %p97 = por %p95, %p96
    %p98 = scmp.ne.s32.totalorder %s89, %s90
    %p99 = scmp.eq.s32.totalorder %s16, 0
    %p100 = por %p98, %p99
    %p101 = scmp.ne.s32.totalorder %s89, %s90
    %p102 = scmp.eq.s32.totalorder %s17, 1
    %p103 = por %p101, %p102
    %p105 = scmp.ne.s32.totalorder %s90, %s104
    %p106 = scmp.eq.s32.totalorder %s17, 0
    %p107 = por %p105, %p106
    %s109 = sadd.s32 %s108, 1
    %p112 = scmp.eq.s32.totalorder %s11, 1
    %p113 = scmp.ne.s32.totalorder %s108, %s110
    %p114 = scmp.eq.s32.totalorder %s11, 0
    %p115 = por %p113, %p114
    %p116 = scmp.ne.s32.totalorder %s108, %s110
    %p117 = scmp.eq.s32.totalorder %s16, 1
    %p118 = por %p116, %p117
    %p119 = scmp.ne.s32.totalorder %s110, %s111
    %p120 = scmp.eq.s32.totalorder %s16, 0
    %p121 = por %p119, %p120
    %p122 = scmp.ne.s32.totalorder %s110, %s111
    %p123 = scmp.eq.s32.totalorder %s17, 1
    %p124 = por %p122, %p123
    %p126 = scmp.ne.s32.totalorder %s111, %s125
    %p127 = scmp.eq.s32.totalorder %s17, 0
    %p128 = por %p126, %p127
    %s129 = ssub.s32 %s11, %s18
    %p130 = scmp.eq.s32.totalorder %s129, 0
    %s132 = sadd.s32 %s131, 1
    %s133 = scalar_select %p130, %s131, %s132
    %p136 = pneg %p130
    %p137 = scmp.eq.s32.totalorder %s11, 1
    %p138 = por %p136, %p137
    %p139 = scmp.ne.s32.totalorder %s131, %s134
    %p140 = scmp.eq.s32.totalorder %s11, 0
    %p141 = por %p139, %p140
    %p142 = scmp.ne.s32.totalorder %s131, %s134
    %p143 = scmp.eq.s32.totalorder %s16, 1
    %p144 = por %p142, %p143
    %p145 = scmp.ne.s32.totalorder %s134, %s135
    %p146 = scmp.eq.s32.totalorder %s16, 0
    %p147 = por %p145, %p146
    %p148 = scmp.ne.s32.totalorder %s134, %s135
    %p149 = scmp.eq.s32.totalorder %s17, 1
    %p150 = por %p148, %p149
    %p152 = scmp.ne.s32.totalorder %s135, %s151
    %p153 = scmp.eq.s32.totalorder %s17, 0
    %p154 = por %p152, %p153
    %p155 = scmp.le.s32.totalorder 1, %s11
    %p156 = scmp.lt.s32.totalorder %s11, 3
    %p157 = pnand %p155, %p156
    %p158 = pneg %p157
    // Predicated region
    $region9: #{conv_block_forward.1} parent=5 // pred_check
      _
    $region10: #{conv_block_forward.1} parent=5 // pred_check_branch
      %160 = sbr.rel (%p157) target = $region12
    $region11: #{conv_block_forward.1} parent=5 // pred_region
      %s161 = ssub.s32 %s11, 1
      // Predicated region
      $region13: #{conv_block_forward.1} parent=11 // pred_check
        %p162 = pneg %p58
      $region14: #{conv_block_forward.1} parent=11 // pred_check_branch
        %164 = sbr.rel (%p162) target = $region16
      $region15: #{conv_block_forward.1} parent=11 // pred_region
        _
      $region16: #{conv_block_forward.1} parent=11 // pred_fallthru
        _
      // Predicated region
      $region17: #{conv_block_forward.1} parent=11 // pred_check
        %p165 = pneg %p79
      $region18: #{conv_block_forward.1} parent=11 // pred_check_branch
        %167 = sbr.rel (%p165) target = $region20
      $region19: #{conv_block_forward.1} parent=11 // pred_region
        _
      $region20: #{conv_block_forward.1} parent=11 // pred_fallthru
        _
      // Predicated region
      $region21: #{conv_block_forward.1} parent=11 // pred_check
        %p168 = pneg %p100
      $region22: #{conv_block_forward.1} parent=11 // pred_check_branch
        %170 = sbr.rel (%p168) target = $region24
      $region23: #{conv_block_forward.1} parent=11 // pred_region
        _
      $region24: #{conv_block_forward.1} parent=11 // pred_fallthru
        _
      // Predicated region
      $region25: #{conv_block_forward.1} parent=11 // pred_check
        %p171 = pneg %p121
      $region26: #{conv_block_forward.1} parent=11 // pred_check_branch
        %173 = sbr.rel (%p171) target = $region28
      $region27: #{conv_block_forward.1} parent=11 // pred_region
        _
      $region28: #{conv_block_forward.1} parent=11 // pred_fallthru
        _
    $region12: #{conv_block_forward.1} parent=5 // pred_fallthru
      _
    %p174 = scmp.lt.s32.totalorder %s11, 2
    // Predicated region
    $region29: #{conv_block_forward.1} parent=5 // pred_check
      %p175 = pneg %p174
    $region30: #{conv_block_forward.1} parent=5 // pred_check_branch
      %177 = sbr.rel (%p175) target = $region32
    $region31: #{conv_block_forward.1} parent=5 // pred_region
      // Predicated region
      $region33: #{conv_block_forward.1} parent=31 // pred_check
        %p178 = pneg %p31
      $region34: #{conv_block_forward.1} parent=31 // pred_check_branch
        %180 = sbr.rel (%p178) target = $region36
      $region35: #{conv_block_forward.1} parent=31 // pred_region
        %p181 = scmp.lt.s32.totalorder %s11, 1
        %s182 = scalar_select %p181, %s11, 1
        %s183 = smul.addr %s182, 32
        %s184 = smul.addr %s183, 4
        %s185 = scalar_lea.vmem %s0, %s184
      $region36: #{conv_block_forward.1} parent=31 // pred_fallthru
        _
    $region32: #{conv_block_forward.1} parent=5 // pred_fallthru
      _
    %p186 = scmp.le.s32.totalorder 1, %s11
    %p187 = scmp.lt.s32.totalorder %s11, 3
    %p188 = pnand %p186, %p187
    %p189 = pneg %p188
    // Predicated region
    $region37: #{conv_block_forward.1} parent=5 // pred_check
      _
    $region38: #{conv_block_forward.1} parent=5 // pred_check_branch
      %191 = sbr.rel (%p188) target = $region40
    $region39: #{conv_block_forward.1} parent=5 // pred_region
      %s192 = ssub.s32 %s11, 1
      %p193 = scmp.lt.s32.totalorder %s16, 1
      %s194 = scalar_select %p193, %s16, 1
      %s195 = smul.addr %s194, 32
      %s196 = smul.addr %s195, 4
      %s197 = scalar_lea.vmem %s0, %s196
      %p198 = pneg %p37
      %p199 = pneg %p34
      %p200 = pneg %p58
      %p201 = pneg %p55
      %p202 = pneg %p79
      %p203 = pneg %p76
      %p204 = pneg %p100
      %p205 = pneg %p97
      %p206 = pneg %p121
      %p207 = pneg %p118
      %p208 = pneg %p147
      %p209 = pneg %p144
      %p210 = scmp.lt.s32.totalorder %s16, 1
      %s211 = scalar_select %p210, %s16, 1
      %s212 = smul.addr %s211, 32
      %s213 = smul.addr %s212, 4
      %s214 = scalar_lea.vmem %s5, %s213
      %p215 = scmp.lt.s32.totalorder %s16, 1
      %s216 = scalar_select %p215, %s16, 1
      %s217 = smul.addr %s216, 32
      %s218 = smul.addr %s217, 4
      %s219 = scalar_lea.vmem %s0, %s218
      %p220 = scmp.lt.s32.totalorder %s16, 1
      %s221 = scalar_select %p220, %s16, 1
      %s222 = smul.addr %s221, 32
      %s223 = smul.addr %s222, 4
      %s224 = scalar_lea.vmem %s5, %s223
      %v226 = vld [vmem:[%s219] sm:$0xf]
      %v227 = vld [vmem:[%s219 + $0x4] sm:$0xf]
      %v228 = vld [vmem:[%s219 + $0x8] sm:$0xf]
      %v229 = vld [vmem:[%s219 + $0xc] sm:$0xf]
      %v230 = vld [vmem:[%s219 + $0x10] sm:$0xf]
      %v231 = vld [vmem:[%s219 + $0x14] sm:$0xf]
      %v232 = vld [vmem:[%s219 + $0x18] sm:$0xf]
      %v233 = vld [vmem:[%s219 + $0x1c] sm:$0xf]
      %v234 = vld [vmem:[%s219 + $0x20] sm:$0xf]
      %v235 = vld [vmem:[%s219 + $0x24] sm:$0xf]
      %v236 = vld [vmem:[%s219 + $0x28] sm:$0xf]
      %v237 = vld [vmem:[%s219 + $0x2c] sm:$0xf]
      %v238 = vld [vmem:[%s219 + $0x30] sm:$0xf]
      %v239 = vld [vmem:[%s219 + $0x34] sm:$0xf]
      %v240 = vld [vmem:[%s219 + $0x38] sm:$0xf]
      %v241 = vld [vmem:[%s219 + $0x3c] sm:$0xf]
      %v242 = vld [vmem:[%s219 + $0x40] sm:$0xf]
      %v243 = vld [vmem:[%s219 + $0x44] sm:$0xf]
      %v244 = vld [vmem:[%s219 + $0x48] sm:$0xf]
      %v245 = vld [vmem:[%s219 + $0x4c] sm:$0xf]
      %v246 = vld [vmem:[%s219 + $0x50] sm:$0xf]
      %v247 = vld [vmem:[%s219 + $0x54] sm:$0xf]
      %v248 = vld [vmem:[%s219 + $0x58] sm:$0xf]
      %v249 = vld [vmem:[%s219 + $0x5c] sm:$0xf]
      %v250 = vld [vmem:[%s219 + $0x60] sm:$0xf]
      %v251 = vld [vmem:[%s219 + $0x64] sm:$0xf]
      %v252 = vld [vmem:[%s219 + $0x68] sm:$0xf]
      %v253 = vld [vmem:[%s219 + $0x6c] sm:$0xf]
      %v254 = vld [vmem:[%s219 + $0x70] sm:$0xf]
      %v255 = vld [vmem:[%s219 + $0x74] sm:$0xf]
      %v256 = vld [vmem:[%s219 + $0x78] sm:$0xf]
      %v257 = vld [vmem:[%s219 + $0x7c] sm:$0xf]
      %v258 = vld [vmem:[%s1] sm:$0xf]
      %v259 = vld [vmem:[%s1 + $0x4] sm:$0xf]
      %v260 = vld [vmem:[%s1 + $0x8] sm:$0xf]
      %v261 = vld [vmem:[%s1 + $0xc] sm:$0xf]
      %v262 = vld [vmem:[%s1 + $0x10] sm:$0x3]
      %v263 = vld [vmem:[%s2] sm:$0x1]
      %v265 = vlaneseq
      %v266 = vshrl.u32 %v265, 7
      %v267 = vsub.s32 0, %v266
      %v268 = vrot.slane %v263, %v267
      %v302 = vunpack.c.l.b16 %v226
      %v303 = vunpack.c.l.b16 %v227
      %v304 = vunpack.c.l.b16 %v228
      %v305 = vunpack.c.l.b16 %v229
      %v306 = vunpack.c.l.b16 %v230
      %v307 = vunpack.c.l.b16 %v231
      %v308 = vunpack.c.l.b16 %v232
      %v309 = vunpack.c.l.b16 %v233
      %v310 = vunpack.c.l.b16 %v234
      %v311 = vunpack.c.l.b16 %v235
      %v312 = vunpack.c.l.b16 %v236
      %v313 = vunpack.c.l.b16 %v237
      %v314 = vunpack.c.l.b16 %v238
      %v315 = vunpack.c.l.b16 %v239
      %v316 = vunpack.c.l.b16 %v240
      %v317 = vunpack.c.l.b16 %v241
      %v318 = vunpack.c.l.b16 %v242
      %v319 = vunpack.c.l.b16 %v243
      %v320 = vunpack.c.l.b16 %v244
      %v321 = vunpack.c.l.b16 %v245
      %v322 = vunpack.c.l.b16 %v246
      %v323 = vunpack.c.l.b16 %v247
      %v324 = vunpack.c.l.b16 %v248
      %v325 = vunpack.c.l.b16 %v249
      %v326 = vunpack.c.l.b16 %v250
      %v327 = vunpack.c.l.b16 %v251
      %v328 = vunpack.c.l.b16 %v252
      %v329 = vunpack.c.l.b16 %v253
      %v330 = vunpack.c.l.b16 %v254
      %v331 = vunpack.c.l.b16 %v255
      %v332 = vunpack.c.l.b16 %v256
      %v333 = vunpack.c.l.b16 %v257
      %v334 = vpack.c.b16 %v303, %v302
      %v335 = vpack.c.b16 %v305, %v304
      %v336 = vpack.c.b16 %v307, %v306
      %v337 = vpack.c.b16 %v309, %v308
      %v338 = vpack.c.b16 %v311, %v310
      %v339 = vpack.c.b16 %v313, %v312
      %v340 = vpack.c.b16 %v315, %v314
      %v341 = vpack.c.b16 %v317, %v316
      %v342 = vpack.c.b16 %v319, %v318
      %v343 = vpack.c.b16 %v321, %v320
      %v344 = vpack.c.b16 %v323, %v322
      %v345 = vpack.c.b16 %v325, %v324
      %v346 = vpack.c.b16 %v327, %v326
      %v347 = vpack.c.b16 %v329, %v328
      %v348 = vpack.c.b16 %v331, %v330
      %v349 = vpack.c.b16 %v333, %v332
      %v355 = vunpack.c.l.b16 %v258
      %v356 = vunpack.c.l.b16 %v259
      %v357 = vunpack.c.l.b16 %v260
      %v358 = vunpack.c.l.b16 %v261
      %v359 = vunpack.c.l.b16 %v262
      %v360 = vpack.c.b16 %v356, %v355
      %v361 = vpack.c.b16 %v358, %v357
      %v362 = vpack.c.b16 %v359, %v359
      %vm365 = vcmask 293888
      %v367 = vsel %vm365, %v334, 0
      %v370 = vsel %vm365, %v335, 0
      %v373 = vsel %vm365, %v336, 0
      %v376 = vsel %vm365, %v337, 0
      %v379 = vsel %vm365, %v338, 0
      %v382 = vsel %vm365, %v339, 0
      %v385 = vsel %vm365, %v340, 0
      %v388 = vsel %vm365, %v341, 0
      %v391 = vsel %vm365, %v342, 0
      %v394 = vsel %vm365, %v343, 0
      %v397 = vsel %vm365, %v344, 0
      %v400 = vsel %vm365, %v345, 0
      %v403 = vsel %vm365, %v346, 0
      %v406 = vsel %vm365, %v347, 0
      %v409 = vsel %vm365, %v348, 0
      %v412 = vsel %vm365, %v349, 0
      %vm414 = vcmask 1041408
      %v416 = vsel %vm414, %v362, 0
      %418 = vmatprep.subr.bf16.mxu0 0
      %419 = vmatpush1.bf16.msra.mxu0 %v360
      %420 = vmatprep.subr.bf16.mxu0 0
      %421 = vmatpush1.bf16.msra.mxu0 %v361
      %422 = vmatprep.subr.bf16.mxu0 0
      %423 = vmatpush1.bf16.msra.mxu0 %v416
      %424 = vmatprep.subr.bf16.mxu0 0
      %425 = vmatpush1.bf16.msra.mxu0 0
      %426 = vmatprep.subr.bf16.mxu0 0
      %427 = vmatpush1.bf16.msra.mxu0 0
      %428 = vmatprep.subr.bf16.mxu0 0
      %429 = vmatpush1.bf16.msra.mxu0 0
      %430 = vmatprep.subr.bf16.mxu0 0
      %431 = vmatpush1.bf16.msra.mxu0 0
      %432 = vmatprep.subr.bf16.mxu0 0
      %433 = vmatpush1.bf16.msra.mxu0 0
      %434 = vmatprep.subr.bf16.mxu0 0
      %435 = vmatpush1.bf16.msra.mxu0 0
      %436 = vmatprep.subr.bf16.mxu0 0
      %437 = vmatpush1.bf16.msra.mxu0 0
      %438 = vmatprep.subr.bf16.mxu0 0
      %439 = vmatpush1.bf16.msra.mxu0 0
      %440 = vmatprep.subr.bf16.mxu0 0
      %441 = vmatpush1.bf16.msra.mxu0 0
      %442 = vmatprep.subr.bf16.mxu0 0
      %443 = vmatpush1.bf16.msra.mxu0 0
      %444 = vmatprep.subr.bf16.mxu0 0
      %445 = vmatpush1.bf16.msra.mxu0 0
      %446 = vmatprep.subr.bf16.mxu0 0
      %447 = vmatpush1.bf16.msra.mxu0 0
      %448 = vmatprep.subr.bf16.mxu0 0
      %449 = vmatpush1.bf16.msra.mxu0 0
      %450 = vmatprep.mubr.bf16.mxu0 0
      %451 = vmatmul.mubr.bf16.gmra.mrb[0].mxu0 %v367
      %v452 = vpop.f32.mrb[0].mxu0
      %v453 = vadd.f32 %v268, %v452
      %v454 = vpop.f32.mrb[0].mxu0
      %v455 = vpop.f32.mrb[0].mxu0
      %v456 = vadd.f32 %v268, %v455
      %v457 = vpop.f32.mrb[0].mxu0
      %458 = vmatprep.mubr.bf16.mxu0 0
      %459 = vmatmul.mubr.bf16.gmra.mrb[0].mxu0 %v370
      %v460 = vpop.f32.mrb[0].mxu0
      %v461 = vadd.f32 %v268, %v460
      %v462 = vpop.f32.mrb[0].mxu0
      %v463 = vpop.f32.mrb[0].mxu0
      %v464 = vadd.f32 %v268, %v463
      %v465 = vpop.f32.mrb[0].mxu0
      %466 = vmatprep.mubr.bf16.mxu0 0
      %467 = vmatmul.mubr.bf16.gmra.mrb[0].mxu0 %v373
      %v468 = vpop.f32.mrb[0].mxu0
      %v469 = vadd.f32 %v268, %v468
      %v470 = vpop.f32.mrb[0].mxu0
      %v471 = vpop.f32.mrb[0].mxu0
      %v472 = vadd.f32 %v268, %v471
      %v473 = vpop.f32.mrb[0].mxu0
      %474 = vmatprep.mubr.bf16.mxu0 0
      %475 = vmatmul.mubr.bf16.gmra.mrb[0].mxu0 %v376
      %v476 = vpop.f32.mrb[0].mxu0
      %v477 = vadd.f32 %v268, %v476
      %v478 = vpop.f32.mrb[0].mxu0
      %v479 = vpop.f32.mrb[0].mxu0
      %v480 = vadd.f32 %v268, %v479
      %v481 = vpop.f32.mrb[0].mxu0
      %482 = vmatprep.mubr.bf16.mxu0 0
      %483 = vmatmul.mubr.bf16.gmra.mrb[0].mxu0 %v379
      %v484 = vpop.f32.mrb[0].mxu0
      %v485 = vadd.f32 %v268, %v484
      %v486 = vpop.f32.mrb[0].mxu0
      %v487 = vpop.f32.mrb[0].mxu0
      %v488 = vadd.f32 %v268, %v487
      %v489 = vpop.f32.mrb[0].mxu0
      %490 = vmatprep.mubr.bf16.mxu0 0
      %491 = vmatmul.mubr.bf16.gmra.mrb[0].mxu0 %v382
      %v492 = vpop.f32.mrb[0].mxu0
      %v493 = vadd.f32 %v268, %v492
      %v494 = vpop.f32.mrb[0].mxu0
      %v495 = vpop.f32.mrb[0].mxu0
      %v496 = vadd.f32 %v268, %v495
      %v497 = vpop.f32.mrb[0].mxu0
      %498 = vmatprep.mubr.bf16.mxu0 0
      %499 = vmatmul.mubr.bf16.gmra.mrb[0].mxu0 %v385
      %v500 = vpop.f32.mrb[0].mxu0
      %v501 = vadd.f32 %v268, %v500
      %v502 = vpop.f32.mrb[0].mxu0
      %v503 = vpop.f32.mrb[0].mxu0
      %v504 = vadd.f32 %v268, %v503
      %v505 = vpop.f32.mrb[0].mxu0
      %506 = vmatprep.mubr.bf16.mxu0 0
      %507 = vmatmul.mubr.bf16.gmra.mrb[0].mxu0 %v388
      %v508 = vpop.f32.mrb[0].mxu0
      %v509 = vadd.f32 %v268, %v508
      %v510 = vpop.f32.mrb[0].mxu0
      %v511 = vpop.f32.mrb[0].mxu0
      %v512 = vadd.f32 %v268, %v511
      %v513 = vpop.f32.mrb[0].mxu0
      %514 = vmatprep.mubr.bf16.mxu0 0
      %515 = vmatmul.mubr.bf16.gmra.mrb[0].mxu0 %v391
      %v516 = vpop.f32.mrb[0].mxu0
      %v517 = vadd.f32 %v268, %v516
      %v518 = vpop.f32.mrb[0].mxu0
      %v519 = vpop.f32.mrb[0].mxu0
      %v520 = vadd.f32 %v268, %v519
      %v521 = vpop.f32.mrb[0].mxu0
      %522 = vmatprep.mubr.bf16.mxu0 0
      %523 = vmatmul.mubr.bf16.gmra.mrb[0].mxu0 %v394
      %v524 = vpop.f32.mrb[0].mxu0
      %v525 = vadd.f32 %v268, %v524
      %v526 = vpop.f32.mrb[0].mxu0
      %v527 = vpop.f32.mrb[0].mxu0
      %v528 = vadd.f32 %v268, %v527
      %v529 = vpop.f32.mrb[0].mxu0
      %530 = vmatprep.mubr.bf16.mxu0 0
      %531 = vmatmul.mubr.bf16.gmra.mrb[0].mxu0 %v397
      %v532 = vpop.f32.mrb[0].mxu0
      %v533 = vadd.f32 %v268, %v532
      %v534 = vpop.f32.mrb[0].mxu0
      %v535 = vpop.f32.mrb[0].mxu0
      %v536 = vadd.f32 %v268, %v535
      %v537 = vpop.f32.mrb[0].mxu0
      %538 = vmatprep.mubr.bf16.mxu0 0
      %539 = vmatmul.mubr.bf16.gmra.mrb[0].mxu0 %v400
      %v540 = vpop.f32.mrb[0].mxu0
      %v541 = vadd.f32 %v268, %v540
      %v542 = vpop.f32.mrb[0].mxu0
      %v543 = vpop.f32.mrb[0].mxu0
      %v544 = vadd.f32 %v268, %v543
      %v545 = vpop.f32.mrb[0].mxu0
      %546 = vmatprep.mubr.bf16.mxu0 0
      %547 = vmatmul.mubr.bf16.gmra.mrb[0].mxu0 %v403
      %v548 = vpop.f32.mrb[0].mxu0
      %v549 = vadd.f32 %v268, %v548
      %v550 = vpop.f32.mrb[0].mxu0
      %v551 = vpop.f32.mrb[0].mxu0
      %v552 = vadd.f32 %v268, %v551
      %v553 = vpop.f32.mrb[0].mxu0
      %554 = vmatprep.mubr.bf16.mxu0 0
      %555 = vmatmul.mubr.bf16.gmra.mrb[0].mxu0 %v406
      %v556 = vpop.f32.mrb[0].mxu0
      %v557 = vadd.f32 %v268, %v556
      %v558 = vpop.f32.mrb[0].mxu0
      %v559 = vpop.f32.mrb[0].mxu0
      %v560 = vadd.f32 %v268, %v559
      %v561 = vpop.f32.mrb[0].mxu0
      %562 = vmatprep.mubr.bf16.mxu0 0
      %563 = vmatmul.mubr.bf16.gmra.mrb[0].mxu0 %v409
      %v564 = vpop.f32.mrb[0].mxu0
      %v565 = vadd.f32 %v268, %v564
      %v566 = vpop.f32.mrb[0].mxu0
      %v567 = vpop.f32.mrb[0].mxu0
      %v568 = vadd.f32 %v268, %v567
      %v569 = vpop.f32.mrb[0].mxu0
      %570 = vmatprep.mubr.bf16.mxu0 0
      %571 = vmatmul.mubr.bf16.gmra.mrb[0].mxu0 %v412
      %v572 = vpop.f32.mrb[0].mxu0
      %v573 = vadd.f32 %v268, %v572
      %v574 = vpop.f32.mrb[0].mxu0
      %v575 = vpop.f32.mrb[0].mxu0
      %v576 = vadd.f32 %v268, %v575
      %v577 = vpop.f32.mrb[0].mxu0
      %578 = vdwg.mxu0
      %v579 = vmax.f32 %v453, 0.0
      %v580 = vmax.f32 %v456, 0.0
      %v581 = vmax.f32 %v461, 0.0
      %v582 = vmax.f32 %v464, 0.0
      %v583 = vmax.f32 %v469, 0.0
      %v584 = vmax.f32 %v472, 0.0
      %v585 = vmax.f32 %v477, 0.0
      %v586 = vmax.f32 %v480, 0.0
      %v587 = vmax.f32 %v485, 0.0
      %v588 = vmax.f32 %v488, 0.0
      %v589 = vmax.f32 %v493, 0.0
      %v590 = vmax.f32 %v496, 0.0
      %v591 = vmax.f32 %v501, 0.0
      %v592 = vmax.f32 %v504, 0.0
      %v593 = vmax.f32 %v509, 0.0
      %v594 = vmax.f32 %v512, 0.0
      %v595 = vmax.f32 %v517, 0.0
      %v596 = vmax.f32 %v520, 0.0
      %v597 = vmax.f32 %v525, 0.0
      %v598 = vmax.f32 %v528, 0.0
      %v599 = vmax.f32 %v533, 0.0
      %v600 = vmax.f32 %v536, 0.0
      %v601 = vmax.f32 %v541, 0.0
      %v602 = vmax.f32 %v544, 0.0
      %v603 = vmax.f32 %v549, 0.0
      %v604 = vmax.f32 %v552, 0.0
      %v605 = vmax.f32 %v557, 0.0
      %v606 = vmax.f32 %v560, 0.0
      %v607 = vmax.f32 %v565, 0.0
      %v608 = vmax.f32 %v568, 0.0
      %v609 = vmax.f32 %v573, 0.0
      %v610 = vmax.f32 %v576, 0.0
      %vm611 = vcmask 60416
      %612 = vst.msk [vmem:[#allocation2] sm:$0xf] %vm611, 0
      %613 = vst.msk [vmem:[#allocation2 + $0x4] sm:$0xf] %vm611, 0
      %vm614 = vcmask 57344
      %615 = vst.msk [vmem:[#allocation2 + $0x8] sm:$0x1] %vm614, 0
      %616 = vst.msk [vmem:[#allocation2 + $0xc] sm:$0xf] %vm611, 0
      %617 = vst.msk [vmem:[#allocation2 + $0x10] sm:$0xf] %vm611, 0
      %618 = vst.msk [vmem:[#allocation2 + $0x14] sm:$0x1] %vm614, 0
      %619 = vst.msk [vmem:[#allocation2 + $0x18] sm:$0xf] %vm611, 0
      %620 = vst.msk [vmem:[#allocation2 + $0x1c] sm:$0xf] %vm611, 0
      %621 = vst.msk [vmem:[#allocation2 + $0x20] sm:$0x1] %vm614, 0
      %622 = vst.msk [vmem:[#allocation2 + $0x24] sm:$0xf] %vm611, 0
      %623 = vst.msk [vmem:[#allocation2 + $0x28] sm:$0xf] %vm611, 0
      %624 = vst.msk [vmem:[#allocation2 + $0x2c] sm:$0x1] %vm614, 0
      %625 = vst.msk [vmem:[#allocation2 + $0x30] sm:$0xf] %vm611, 0
      %626 = vst.msk [vmem:[#allocation2 + $0x34] sm:$0xf] %vm611, 0
      %627 = vst.msk [vmem:[#allocation2 + $0x38] sm:$0x1] %vm614, 0
      %628 = vst.msk [vmem:[#allocation2 + $0x3c] sm:$0xf] %vm611, 0
      %629 = vst.msk [vmem:[#allocation2 + $0x40] sm:$0xf] %vm611, 0
      %630 = vst.msk [vmem:[#allocation2 + $0x44] sm:$0x1] %vm614, 0
      %631 = vst.msk [vmem:[#allocation2 + $0x48] sm:$0xf] %vm611, 0
      %632 = vst.msk [vmem:[#allocation2 + $0x4c] sm:$0xf] %vm611, 0
      %633 = vst.msk [vmem:[#allocation2 + $0x50] sm:$0x1] %vm614, 0
      %634 = vst.msk [vmem:[#allocation2 + $0x54] sm:$0xf] %vm611, 0
      %635 = vst.msk [vmem:[#allocation2 + $0x58] sm:$0xf] %vm611, 0
      %636 = vst.msk [vmem:[#allocation2 + $0x5c] sm:$0x1] %vm614, 0
      %637 = vst.msk [vmem:[#allocation2 + $0x60] sm:$0xf] %vm611, 0
      %638 = vst.msk [vmem:[#allocation2 + $0x64] sm:$0xf] %vm611, 0
      %639 = vst.msk [vmem:[#allocation2 + $0x68] sm:$0x1] %vm614, 0
      %640 = vst.msk [vmem:[#allocation2 + $0x6c] sm:$0xf] %vm611, 0
      %641 = vst.msk [vmem:[#allocation2 + $0x70] sm:$0xf] %vm611, 0
      %642 = vst.msk [vmem:[#allocation2 + $0x74] sm:$0x1] %vm614, 0
      %643 = vst.msk [vmem:[#allocation2 + $0x78] sm:$0xf] %vm611, 0
      %644 = vst.msk [vmem:[#allocation2 + $0x7c] sm:$0xf] %vm611, 0
      %645 = vst.msk [vmem:[#allocation2 + $0x80] sm:$0x1] %vm614, 0
      %646 = vst.msk [vmem:[#allocation2 + $0x84] sm:$0xf] %vm611, 0
      %647 = vst.msk [vmem:[#allocation2 + $0x88] sm:$0xf] %vm611, 0
      %648 = vst.msk [vmem:[#allocation2 + $0x8c] sm:$0x1] %vm614, 0
      %649 = vst.msk [vmem:[#allocation2 + $0x90] sm:$0xf] %vm611, 0
      %650 = vst.msk [vmem:[#allocation2 + $0x94] sm:$0xf] %vm611, 0
      %651 = vst.msk [vmem:[#allocation2 + $0x98] sm:$0x1] %vm614, 0
      %652 = vst.msk [vmem:[#allocation2 + $0x9c] sm:$0xf] %vm611, 0
      %653 = vst.msk [vmem:[#allocation2 + $0xa0] sm:$0xf] %vm611, 0
      %654 = vst.msk [vmem:[#allocation2 + $0xa4] sm:$0x1] %vm614, 0
      %655 = vst.msk [vmem:[#allocation2 + $0xa8] sm:$0xf] %vm611, 0
      %656 = vst.msk [vmem:[#allocation2 + $0xac] sm:$0xf] %vm611, 0
      %657 = vst.msk [vmem:[#allocation2 + $0xb0] sm:$0x1] %vm614, 0
      %658 = vst.msk [vmem:[#allocation2 + $0xb4] sm:$0xf] %vm611, 0
      %659 = vst.msk [vmem:[#allocation2 + $0xb8] sm:$0xf] %vm611, 0
      %660 = vst.msk [vmem:[#allocation2 + $0xbc] sm:$0x1] %vm614, 0
      %661 = vst.msk [vmem:[#allocation2 + $0xc0] sm:$0xf] %vm611, 0
      %662 = vst.msk [vmem:[#allocation2 + $0xc4] sm:$0xf] %vm611, 0
      %663 = vst.msk [vmem:[#allocation2 + $0xc8] sm:$0x1] %vm614, 0
      %664 = vst.msk [vmem:[#allocation2 + $0xcc] sm:$0xf] %vm611, 0
      %665 = vst.msk [vmem:[#allocation2 + $0xd0] sm:$0xf] %vm611, 0
      %666 = vst.msk [vmem:[#allocation2 + $0xd4] sm:$0x1] %vm614, 0
      %v667 = vpack.c.bf16 %v580, %v579
      %v668 = vpack.c.bf16 %v582, %v581
      %v669 = vpack.c.bf16 %v584, %v583
      %v670 = vpack.c.bf16 %v586, %v585
      %v671 = vpack.c.bf16 %v588, %v587
      %v672 = vpack.c.bf16 %v590, %v589
      %v673 = vpack.c.bf16 %v592, %v591
      %v674 = vpack.c.bf16 %v594, %v593
      %v675 = vpack.c.bf16 %v596, %v595
      %v676 = vpack.c.bf16 %v598, %v597
      %v677 = vpack.c.bf16 %v600, %v599
      %v678 = vpack.c.bf16 %v602, %v601
      %v679 = vpack.c.bf16 %v604, %v603
      %v680 = vpack.c.bf16 %v606, %v605
      %v681 = vpack.c.bf16 %v608, %v607
      %v682 = vpack.c.bf16 %v610, %v609
      %v699 = vunpack.c.l.b16 %v667
      %v700 = vunpack.c.h.b16 %v667
      %v701 = vunpack.c.l.b16 %v668
      %v702 = vunpack.c.h.b16 %v668
      %v703 = vunpack.c.l.b16 %v669
      %v704 = vunpack.c.h.b16 %v669
      %v705 = vunpack.c.l.b16 %v670
      %v706 = vunpack.c.h.b16 %v670
      %v707 = vunpack.c.l.b16 %v671
      %v708 = vunpack.c.h.b16 %v671
      %v709 = vunpack.c.l.b16 %v672
      %v710 = vunpack.c.h.b16 %v672
      %v711 = vunpack.c.l.b16 %v673
      %v712 = vunpack.c.h.b16 %v673
      %v713 = vunpack.c.l.b16 %v674
      %v714 = vunpack.c.h.b16 %v674
      %v715 = vunpack.c.l.b16 %v675
      %v716 = vunpack.c.h.b16 %v675
      %v717 = vunpack.c.l.b16 %v676
      %v718 = vunpack.c.h.b16 %v676
      %v719 = vunpack.c.l.b16 %v677
      %v720 = vunpack.c.h.b16 %v677
      %v721 = vunpack.c.l.b16 %v678
      %v722 = vunpack.c.h.b16 %v678
      %v723 = vunpack.c.l.b16 %v679
      %v724 = vunpack.c.h.b16 %v679
      %v725 = vunpack.c.l.b16 %v680
      %v726 = vunpack.c.h.b16 %v680
      %v727 = vunpack.c.l.b16 %v681
      %v728 = vunpack.c.h.b16 %v681
      %v729 = vunpack.c.l.b16 %v682
      %v730 = vunpack.c.h.b16 %v682
      %v731 = vpack.c.b16 %v699, %v699
      %v732 = vpack.c.b16 %v700, %v700
      %v733 = vpack.c.b16 %v701, %v701
      %v734 = vpack.c.b16 %v702, %v702
      %v735 = vpack.c.b16 %v703, %v703
      %v736 = vpack.c.b16 %v704, %v704
      %v737 = vpack.c.b16 %v705, %v705
      %v738 = vpack.c.b16 %v706, %v706
      %v739 = vpack.c.b16 %v707, %v707
      %v740 = vpack.c.b16 %v708, %v708
      %v741 = vpack.c.b16 %v709, %v709
      %v742 = vpack.c.b16 %v710, %v710
      %v743 = vpack.c.b16 %v711, %v711
      %v744 = vpack.c.b16 %v712, %v712
      %v745 = vpack.c.b16 %v713, %v713
      %v746 = vpack.c.b16 %v714, %v714
      %v747 = vpack.c.b16 %v715, %v715
      %v748 = vpack.c.b16 %v716, %v716
      %v749 = vpack.c.b16 %v717, %v717
      %v750 = vpack.c.b16 %v718, %v718
      %v751 = vpack.c.b16 %v719, %v719
      %v752 = vpack.c.b16 %v720, %v720
      %v753 = vpack.c.b16 %v721, %v721
      %v754 = vpack.c.b16 %v722, %v722
      %v755 = vpack.c.b16 %v723, %v723
      %v756 = vpack.c.b16 %v724, %v724
      %v757 = vpack.c.b16 %v725, %v725
      %v758 = vpack.c.b16 %v726, %v726
      %v759 = vpack.c.b16 %v727, %v727
      %v760 = vpack.c.b16 %v728, %v728
      %v761 = vpack.c.b16 %v729, %v729
      %v762 = vpack.c.b16 %v730, %v730
      %vm763 = vsmask.f32 256
      %vm764 = vsmask.f32 4368
      %vm765 = vmor %vm763, %vm764
      %v767 = vshrl.u32 %v731, 16
      %v769 = vrot.slane %v767, 7
      %v770 = vshll.u32 %v731, 16
      %v772 = vor.u32 %v769, %v770
      %v773 = vrot.slane %v769, 4
      %v775 = vshrl.u32 %v732, 16
      %v777 = vrot.slane %v775, 7
      %v778 = vshll.u32 %v732, 16
      %v780 = vor.u32 %v777, %v778
      %v781 = vsel %vm765, %v773, %v780
      %v782 = vrot.slane %v777, 4
      %v784 = vshrl.u32 %v733, 16
      %v786 = vrot.slane %v784, 7
      %v787 = vshll.u32 %v733, 16
      %v789 = vor.u32 %v786, %v787
      %v790 = vrot.slane %v786, 4
      %v792 = vshrl.u32 %v734, 16
      %v794 = vrot.slane %v792, 7
      %v795 = vshll.u32 %v734, 16
      %v797 = vor.u32 %v794, %v795
      %v798 = vsel %vm765, %v790, %v797
      %v799 = vrot.slane %v794, 4
      %v801 = vshrl.u32 %v735, 16
      %v803 = vrot.slane %v801, 7
      %v804 = vshll.u32 %v735, 16
      %v806 = vor.u32 %v803, %v804
      %v807 = vrot.slane %v803, 4
      %v809 = vshrl.u32 %v736, 16
      %v811 = vrot.slane %v809, 7
      %v812 = vshll.u32 %v736, 16
      %v814 = vor.u32 %v811, %v812
      %v815 = vsel %vm765, %v807, %v814
      %v816 = vrot.slane %v811, 4
      %v818 = vshrl.u32 %v737, 16
      %v820 = vrot.slane %v818, 7
      %v821 = vshll.u32 %v737, 16
      %v823 = vor.u32 %v820, %v821
      %v824 = vrot.slane %v820, 4
      %v826 = vshrl.u32 %v738, 16
      %v828 = vrot.slane %v826, 7
      %v829 = vshll.u32 %v738, 16
      %v831 = vor.u32 %v828, %v829
      %v832 = vsel %vm765, %v824, %v831
      %v833 = vrot.slane %v828, 4
      %v835 = vshrl.u32 %v739, 16
      %v837 = vrot.slane %v835, 7
      %v838 = vshll.u32 %v739, 16
      %v840 = vor.u32 %v837, %v838
      %v841 = vrot.slane %v837, 4
      %v843 = vshrl.u32 %v740, 16
      %v845 = vrot.slane %v843, 7
      %v846 = vshll.u32 %v740, 16
      %v848 = vor.u32 %v845, %v846
      %v849 = vsel %vm765, %v841, %v848
      %v850 = vrot.slane %v845, 4
      %v852 = vshrl.u32 %v741, 16
      %v854 = vrot.slane %v852, 7
      %v855 = vshll.u32 %v741, 16
      %v857 = vor.u32 %v854, %v855
      %v858 = vrot.slane %v854, 4
      %v860 = vshrl.u32 %v742, 16
      %v862 = vrot.slane %v860, 7
      %v863 = vshll.u32 %v742, 16
      %v865 = vor.u32 %v862, %v863
      %v866 = vsel %vm765, %v858, %v865
      %v867 = vrot.slane %v862, 4
      %v869 = vshrl.u32 %v743, 16
      %v871 = vrot.slane %v869, 7
      %v872 = vshll.u32 %v743, 16
      %v874 = vor.u32 %v871, %v872
      %v875 = vrot.slane %v871, 4
      %v877 = vshrl.u32 %v744, 16
      %v879 = vrot.slane %v877, 7
      %v880 = vshll.u32 %v744, 16
      %v882 = vor.u32 %v879, %v880
      %v883 = vsel %vm765, %v875, %v882
      %v884 = vrot.slane %v879, 4
      %v886 = vshrl.u32 %v745, 16
      %v888 = vrot.slane %v886, 7
      %v889 = vshll.u32 %v745, 16
      %v891 = vor.u32 %v888, %v889
      %v892 = vrot.slane %v888, 4
      %v894 = vshrl.u32 %v746, 16
      %v896 = vrot.slane %v894, 7
      %v897 = vshll.u32 %v746, 16
      %v899 = vor.u32 %v896, %v897
      %v900 = vsel %vm765, %v892, %v899
      %v901 = vrot.slane %v896, 4
      %v903 = vshrl.u32 %v747, 16
      %v905 = vrot.slane %v903, 7
      %v906 = vshll.u32 %v747, 16
      %v908 = vor.u32 %v905, %v906
      %v909 = vrot.slane %v905, 4
      %v911 = vshrl.u32 %v748, 16
      %v913 = vrot.slane %v911, 7
      %v914 = vshll.u32 %v748, 16
      %v916 = vor.u32 %v913, %v914
      %v917 = vsel %vm765, %v909, %v916
      %v918 = vrot.slane %v913, 4
      %v920 = vshrl.u32 %v749, 16
      %v922 = vrot.slane %v920, 7
      %v923 = vshll.u32 %v749, 16
      %v925 = vor.u32 %v922, %v923
      %v926 = vrot.slane %v922, 4
      %v928 = vshrl.u32 %v750, 16
      %v930 = vrot.slane %v928, 7
      %v931 = vshll.u32 %v750, 16
      %v933 = vor.u32 %v930, %v931
      %v934 = vsel %vm765, %v926, %v933
      %v935 = vrot.slane %v930, 4
      %v937 = vshrl.u32 %v751, 16
      %v939 = vrot.slane %v937, 7
      %v940 = vshll.u32 %v751, 16
      %v942 = vor.u32 %v939, %v940
      %v943 = vrot.slane %v939, 4
      %v945 = vshrl.u32 %v752, 16
      %v947 = vrot.slane %v945, 7
      %v948 = vshll.u32 %v752, 16
      %v950 = vor.u32 %v947, %v948
      %v951 = vsel %vm765, %v943, %v950
      %v952 = vrot.slane %v947, 4
      %v954 = vshrl.u32 %v753, 16
      %v956 = vrot.slane %v954, 7
      %v957 = vshll.u32 %v753, 16
      %v959 = vor.u32 %v956, %v957
      %v960 = vrot.slane %v956, 4
      %v962 = vshrl.u32 %v754, 16
      %v964 = vrot.slane %v962, 7
      %v965 = vshll.u32 %v754, 16
      %v967 = vor.u32 %v964, %v965
      %v968 = vsel %vm765, %v960, %v967
      %v969 = vrot.slane %v964, 4
      %v971 = vshrl.u32 %v755, 16
      %v973 = vrot.slane %v971, 7
      %v974 = vshll.u32 %v755, 16
      %v976 = vor.u32 %v973, %v974
      %v977 = vrot.slane %v973, 4
      %v979 = vshrl.u32 %v756, 16
      %v981 = vrot.slane %v979, 7
      %v982 = vshll.u32 %v756, 16
      %v984 = vor.u32 %v981, %v982
      %v985 = vsel %vm765, %v977, %v984
      %v986 = vrot.slane %v981, 4
      %v988 = vshrl.u32 %v757, 16
      %v990 = vrot.slane %v988, 7
      %v991 = vshll.u32 %v757, 16
      %v993 = vor.u32 %v990, %v991
      %v994 = vrot.slane %v990, 4
      %v996 = vshrl.u32 %v758, 16
      %v998 = vrot.slane %v996, 7
      %v999 = vshll.u32 %v758, 16
      %v1001 = vor.u32 %v998, %v999
      %v1002 = vsel %vm765, %v994, %v1001
      %v1003 = vrot.slane %v998, 4
      %v1005 = vshrl.u32 %v759, 16
      %v1007 = vrot.slane %v1005, 7
      %v1008 = vshll.u32 %v759, 16
      %v1010 = vor.u32 %v1007, %v1008
      %v1011 = vrot.slane %v1007, 4
      %v1013 = vshrl.u32 %v760, 16
      %v1015 = vrot.slane %v1013, 7
      %v1016 = vshll.u32 %v760, 16
      %v1018 = vor.u32 %v1015, %v1016
      %v1019 = vsel %vm765, %v1011, %v1018
      %v1020 = vrot.slane %v1015, 4
      %v1022 = vshrl.u32 %v761, 16
      %v1024 = vrot.slane %v1022, 7
      %v1025 = vshll.u32 %v761, 16
      %v1027 = vor.u32 %v1024, %v1025
      %v1028 = vrot.slane %v1024, 4
      %v1030 = vshrl.u32 %v762, 16
      %v1032 = vrot.slane %v1030, 7
      %v1033 = vshll.u32 %v762, 16
      %v1035 = vor.u32 %v1032, %v1033
      %v1036 = vsel %vm765, %v1028, %v1035
      %v1037 = vrot.slane %v1032, 4
      %s1086 = scalar_lea.vmem [#allocation2], 12
      %vm1087 = vcmask 60416
      %vm1088 = vsmask.f32 7938
      %vm1089 = vmand %vm1087, %vm1088
      %v1090 = vld [vmem:[%s1086] sm:$0xf]
      %v1091 = vsel %vm1089, %v772, %v1090
      %1092 = vst [vmem:[%s1086] sm:$0xf] %v1091
      %1093 = vst.msk [vmem:[%s1086 + $0x4] sm:$0xf] %vm611, %v781
      %vm1094 = vcmask 57344
      %vm1095 = vmand %vm1094, %vm763
      %v1096 = vld [vmem:[%s1086 + $0x8] sm:$0x1]
      %v1097 = vsel %vm1095, %v782, %v1096
      %1098 = vst [vmem:[%s1086 + $0x8] sm:$0x1] %v1097
      %v1099 = vld [vmem:[%s1086 + $0xc] sm:$0xf]
      %v1100 = vsel %vm1089, %v789, %v1099
      %1101 = vst [vmem:[%s1086 + $0xc] sm:$0xf] %v1100
      %1102 = vst.msk [vmem:[%s1086 + $0x10] sm:$0xf] %vm611, %v798
      %v1103 = vld [vmem:[%s1086 + $0x14] sm:$0x1]
      %v1104 = vsel %vm1095, %v799, %v1103
      %1105 = vst [vmem:[%s1086 + $0x14] sm:$0x1] %v1104
      %v1106 = vld [vmem:[%s1086 + $0x18] sm:$0xf]
      %v1107 = vsel %vm1089, %v806, %v1106
      %1108 = vst [vmem:[%s1086 + $0x18] sm:$0xf] %v1107
      %1109 = vst.msk [vmem:[%s1086 + $0x1c] sm:$0xf] %vm611, %v815
      %v1110 = vld [vmem:[%s1086 + $0x20] sm:$0x1]
      %v1111 = vsel %vm1095, %v816, %v1110
      %1112 = vst [vmem:[%s1086 + $0x20] sm:$0x1] %v1111
      %v1113 = vld [vmem:[%s1086 + $0x24] sm:$0xf]
      %v1114 = vsel %vm1089, %v823, %v1113
      %1115 = vst [vmem:[%s1086 + $0x24] sm:$0xf] %v1114
      %1116 = vst.msk [vmem:[%s1086 + $0x28] sm:$0xf] %vm611, %v832
      %v1117 = vld [vmem:[%s1086 + $0x2c] sm:$0x1]
      %v1118 = vsel %vm1095, %v833, %v1117
      %1119 = vst [vmem:[%s1086 + $0x2c] sm:$0x1] %v1118
      %v1120 = vld [vmem:[%s1086 + $0x30] sm:$0xf]
      %v1121 = vsel %vm1089, %v840, %v1120
      %1122 = vst [vmem:[%s1086 + $0x30] sm:$0xf] %v1121
      %1123 = vst.msk [vmem:[%s1086 + $0x34] sm:$0xf] %vm611, %v849
      %v1124 = vld [vmem:[%s1086 + $0x38] sm:$0x1]
      %v1125 = vsel %vm1095, %v850, %v1124
      %1126 = vst [vmem:[%s1086 + $0x38] sm:$0x1] %v1125
      %v1127 = vld [vmem:[%s1086 + $0x3c] sm:$0xf]
      %v1128 = vsel %vm1089, %v857, %v1127
      %1129 = vst [vmem:[%s1086 + $0x3c] sm:$0xf] %v1128
      %1130 = vst.msk [vmem:[%s1086 + $0x40] sm:$0xf] %vm611, %v866
      %v1131 = vld [vmem:[%s1086 + $0x44] sm:$0x1]
      %v1132 = vsel %vm1095, %v867, %v1131
      %1133 = vst [vmem:[%s1086 + $0x44] sm:$0x1] %v1132
      %v1134 = vld [vmem:[%s1086 + $0x48] sm:$0xf]
      %v1135 = vsel %vm1089, %v874, %v1134
      %1136 = vst [vmem:[%s1086 + $0x48] sm:$0xf] %v1135
      %1137 = vst.msk [vmem:[%s1086 + $0x4c] sm:$0xf] %vm611, %v883
      %v1138 = vld [vmem:[%s1086 + $0x50] sm:$0x1]
      %v1139 = vsel %vm1095, %v884, %v1138
      %1140 = vst [vmem:[%s1086 + $0x50] sm:$0x1] %v1139
      %v1141 = vld [vmem:[%s1086 + $0x54] sm:$0xf]
      %v1142 = vsel %vm1089, %v891, %v1141
      %1143 = vst [vmem:[%s1086 + $0x54] sm:$0xf] %v1142
      %1144 = vst.msk [vmem:[%s1086 + $0x58] sm:$0xf] %vm611, %v900
      %v1145 = vld [vmem:[%s1086 + $0x5c] sm:$0x1]
      %v1146 = vsel %vm1095, %v901, %v1145
      %1147 = vst [vmem:[%s1086 + $0x5c] sm:$0x1] %v1146
      %v1148 = vld [vmem:[%s1086 + $0x60] sm:$0xf]
      %v1149 = vsel %vm1089, %v908, %v1148
      %1150 = vst [vmem:[%s1086 + $0x60] sm:$0xf] %v1149
      %1151 = vst.msk [vmem:[%s1086 + $0x64] sm:$0xf] %vm611, %v917
      %v1152 = vld [vmem:[%s1086 + $0x68] sm:$0x1]
      %v1153 = vsel %vm1095, %v918, %v1152
      %1154 = vst [vmem:[%s1086 + $0x68] sm:$0x1] %v1153
      %v1155 = vld [vmem:[%s1086 + $0x6c] sm:$0xf]
      %v1156 = vsel %vm1089, %v925, %v1155
      %1157 = vst [vmem:[%s1086 + $0x6c] sm:$0xf] %v1156
      %1158 = vst.msk [vmem:[%s1086 + $0x70] sm:$0xf] %vm611, %v934
      %v1159 = vld [vmem:[%s1086 + $0x74] sm:$0x1]
      %v1160 = vsel %vm1095, %v935, %v1159
      %1161 = vst [vmem:[%s1086 + $0x74] sm:$0x1] %v1160
      %v1162 = vld [vmem:[%s1086 + $0x78] sm:$0xf]
      %v1163 = vsel %vm1089, %v942, %v1162
      %1164 = vst [vmem:[%s1086 + $0x78] sm:$0xf] %v1163
      %1165 = vst.msk [vmem:[%s1086 + $0x7c] sm:$0xf] %vm611, %v951
      %v1166 = vld [vmem:[%s1086 + $0x80] sm:$0x1]
      %v1167 = vsel %vm1095, %v952, %v1166
      %1168 = vst [vmem:[%s1086 + $0x80] sm:$0x1] %v1167
      %v1169 = vld [vmem:[%s1086 + $0x84] sm:$0xf]
      %v1170 = vsel %vm1089, %v959, %v1169
      %1171 = vst [vmem:[%s1086 + $0x84] sm:$0xf] %v1170
      %1172 = vst.msk [vmem:[%s1086 + $0x88] sm:$0xf] %vm611, %v968
      %v1173 = vld [vmem:[%s1086 + $0x8c] sm:$0x1]
      %v1174 = vsel %vm1095, %v969, %v1173
      %1175 = vst [vmem:[%s1086 + $0x8c] sm:$0x1] %v1174
      %v1176 = vld [vmem:[%s1086 + $0x90] sm:$0xf]
      %v1177 = vsel %vm1089, %v976, %v1176
      %1178 = vst [vmem:[%s1086 + $0x90] sm:$0xf] %v1177
      %1179 = vst.msk [vmem:[%s1086 + $0x94] sm:$0xf] %vm611, %v985
      %v1180 = vld [vmem:[%s1086 + $0x98] sm:$0x1]
      %v1181 = vsel %vm1095, %v986, %v1180
      %1182 = vst [vmem:[%s1086 + $0x98] sm:$0x1] %v1181
      %v1183 = vld [vmem:[%s1086 + $0x9c] sm:$0xf]
      %v1184 = vsel %vm1089, %v993, %v1183
      %1185 = vst [vmem:[%s1086 + $0x9c] sm:$0xf] %v1184
      %1186 = vst.msk [vmem:[%s1086 + $0xa0] sm:$0xf] %vm611, %v1002
      %v1187 = vld [vmem:[%s1086 + $0xa4] sm:$0x1]
      %v1188 = vsel %vm1095, %v1003, %v1187
      %1189 = vst [vmem:[%s1086 + $0xa4] sm:$0x1] %v1188
      %v1190 = vld [vmem:[%s1086 + $0xa8] sm:$0xf]
      %v1191 = vsel %vm1089, %v1010, %v1190
      %1192 = vst [vmem:[%s1086 + $0xa8] sm:$0xf] %v1191
      %1193 = vst.msk [vmem:[%s1086 + $0xac] sm:$0xf] %vm611, %v1019
      %v1194 = vld [vmem:[%s1086 + $0xb0] sm:$0x1]
      %v1195 = vsel %vm1095, %v1020, %v1194
      %1196 = vst [vmem:[%s1086 + $0xb0] sm:$0x1] %v1195
      %v1197 = vld [vmem:[%s1086 + $0xb4] sm:$0xf]
      %v1198 = vsel %vm1089, %v1027, %v1197
      %1199 = vst [vmem:[%s1086 + $0xb4] sm:$0xf] %v1198
      %1200 = vst.msk [vmem:[%s1086 + $0xb8] sm:$0xf] %vm611, %v1036
      %v1201 = vld [vmem:[%s1086 + $0xbc] sm:$0x1]
      %v1202 = vsel %vm1095, %v1037, %v1201
      %1203 = vst [vmem:[%s1086 + $0xbc] sm:$0x1] %v1202
      %v1204 = vld [vmem:[#allocation2] sm:$0xf]
      %v1205 = vld [vmem:[#allocation2 + $0x4] sm:$0xf]
      %v1206 = vld [vmem:[#allocation2 + $0xc] sm:$0xf]
      %v1207 = vld [vmem:[#allocation2 + $0x10] sm:$0xf]
      %v1208 = vld [vmem:[#allocation2 + $0x18] sm:$0xf]
      %v1209 = vld [vmem:[#allocation2 + $0x1c] sm:$0xf]
      %v1210 = vld [vmem:[#allocation2 + $0x24] sm:$0xf]
      %v1211 = vld [vmem:[#allocation2 + $0x28] sm:$0xf]
      %v1212 = vld [vmem:[#allocation2 + $0x30] sm:$0xf]
      %v1213 = vld [vmem:[#allocation2 + $0x34] sm:$0xf]
      %v1214 = vld [vmem:[#allocation2 + $0x3c] sm:$0xf]
      %v1215 = vld [vmem:[#allocation2 + $0x40] sm:$0xf]
      %v1216 = vld [vmem:[#allocation2 + $0x48] sm:$0xf]
      %v1217 = vld [vmem:[#allocation2 + $0x4c] sm:$0xf]
      %v1218 = vld [vmem:[#allocation2 + $0x54] sm:$0xf]
      %v1219 = vld [vmem:[#allocation2 + $0x58] sm:$0xf]
      %v1220 = vld [vmem:[#allocation2 + $0x60] sm:$0xf]
      %v1221 = vld [vmem:[#allocation2 + $0x64] sm:$0xf]
      %v1222 = vld [vmem:[#allocation2 + $0x6c] sm:$0xf]
      %v1223 = vld [vmem:[#allocation2 + $0x70] sm:$0xf]
      %v1224 = vld [vmem:[#allocation2 + $0x78] sm:$0xf]
      %v1225 = vld [vmem:[#allocation2 + $0x7c] sm:$0xf]
      %v1226 = vld [vmem:[#allocation2 + $0x84] sm:$0xf]
      %v1227 = vld [vmem:[#allocation2 + $0x88] sm:$0xf]
      %v1228 = vld [vmem:[#allocation2 + $0x90] sm:$0xf]
      %v1229 = vld [vmem:[#allocation2 + $0x94] sm:$0xf]
      %v1230 = vld [vmem:[#allocation2 + $0x9c] sm:$0xf]
      %v1231 = vld [vmem:[#allocation2 + $0xa0] sm:$0xf]
      %v1232 = vld [vmem:[#allocation2 + $0xa8] sm:$0xf]
      %v1233 = vld [vmem:[#allocation2 + $0xac] sm:$0xf]
      %v1234 = vld [vmem:[#allocation2 + $0xb4] sm:$0xf]
      %v1235 = vld [vmem:[#allocation2 + $0xb8] sm:$0xf]
      %v1236 = vld [vmem:[#allocation2 + $0xc0] sm:$0xf]
      %v1237 = vld [vmem:[#allocation2 + $0xc4] sm:$0xf]
      %v1238 = vld [vmem:[#allocation2 + $0xcc] sm:$0xf]
      %v1239 = vld [vmem:[#allocation2 + $0xd0] sm:$0xf]
      %v1240 = vld [vmem:[#allocation2 + $0x8] sm:$0x1]
      %v1241 = vld [vmem:[#allocation2 + $0x14] sm:$0x1]
      %v1242 = vld [vmem:[#allocation2 + $0x20] sm:$0x1]
      %v1243 = vld [vmem:[#allocation2 + $0x2c] sm:$0x1]
      %v1244 = vld [vmem:[#allocation2 + $0x38] sm:$0x1]
      %v1245 = vld [vmem:[#allocation2 + $0x44] sm:$0x1]
      %v1246 = vld [vmem:[#allocation2 + $0x50] sm:$0x1]
      %v1247 = vld [vmem:[#allocation2 + $0x5c] sm:$0x1]
      %v1248 = vld [vmem:[#allocation2 + $0x68] sm:$0x1]
      %v1249 = vld [vmem:[#allocation2 + $0x74] sm:$0x1]
      %v1250 = vld [vmem:[#allocation2 + $0x80] sm:$0x1]
      %v1251 = vld [vmem:[#allocation2 + $0x8c] sm:$0x1]
      %v1252 = vld [vmem:[#allocation2 + $0x98] sm:$0x1]
      %v1253 = vld [vmem:[#allocation2 + $0xa4] sm:$0x1]
      %v1254 = vld [vmem:[#allocation2 + $0xb0] sm:$0x1]
      %v1255 = vld [vmem:[#allocation2 + $0xbc] sm:$0x1]
      %v1256 = vld [vmem:[#allocation2 + $0xc8] sm:$0x1]
      %v1257 = vld [vmem:[#allocation2 + $0xd4] sm:$0x1]
      %v1258 = vld [vmem:[#allocation2] sm:$0xe]
      %v1259 = vld [vmem:[#allocation2 + $0xc] sm:$0xe]
      %v1260 = vld [vmem:[#allocation2 + $0x18] sm:$0xe]
      %v1261 = vld [vmem:[#allocation2 + $0x24] sm:$0xe]
      %v1262 = vld [vmem:[#allocation2 + $0x30] sm:$0xe]
      %v1263 = vld [vmem:[#allocation2 + $0x3c] sm:$0xe]
      %v1264 = vld [vmem:[#allocation2 + $0x48] sm:$0xe]
      %v1265 = vld [vmem:[#allocation2 + $0x54] sm:$0xe]
      %v1266 = vld [vmem:[#allocation2 + $0x60] sm:$0xe]
      %v1267 = vld [vmem:[#allocation2 + $0x6c] sm:$0xe]
      %v1268 = vld [vmem:[#allocation2 + $0x78] sm:$0xe]
      %v1269 = vld [vmem:[#allocation2 + $0x84] sm:$0xe]
      %v1270 = vld [vmem:[#allocation2 + $0x90] sm:$0xe]
      %v1271 = vld [vmem:[#allocation2 + $0x9c] sm:$0xe]
      %v1272 = vld [vmem:[#allocation2 + $0xa8] sm:$0xe]
      %v1273 = vld [vmem:[#allocation2 + $0xb4] sm:$0xe]
      %v1274 = vld [vmem:[#allocation2 + $0xc0] sm:$0xe]
      %v1275 = vld [vmem:[#allocation2 + $0xcc] sm:$0xe]
      %v1312 = vunpack.c.l.b16 %v1204
      %v1313 = vunpack.c.l.b16 %v1205
      %v1314 = vunpack.c.l.b16 %v1206
      %v1315 = vunpack.c.l.b16 %v1207
      %v1316 = vunpack.c.l.b16 %v1208
      %v1317 = vunpack.c.l.b16 %v1209
      %v1318 = vunpack.c.l.b16 %v1210
      %v1319 = vunpack.c.l.b16 %v1211
      %v1320 = vunpack.c.l.b16 %v1212
      %v1321 = vunpack.c.l.b16 %v1213
      %v1322 = vunpack.c.l.b16 %v1214
      %v1323 = vunpack.c.l.b16 %v1215
      %v1324 = vunpack.c.l.b16 %v1216
      %v1325 = vunpack.c.l.b16 %v1217
      %v1326 = vunpack.c.l.b16 %v1218
      %v1327 = vunpack.c.l.b16 %v1219
      %v1328 = vunpack.c.l.b16 %v1220
      %v1329 = vunpack.c.l.b16 %v1221
      %v1330 = vunpack.c.l.b16 %v1222
      %v1331 = vunpack.c.l.b16 %v1223
      %v1332 = vunpack.c.l.b16 %v1224
      %v1333 = vunpack.c.l.b16 %v1225
      %v1334 = vunpack.c.l.b16 %v1226
      %v1335 = vunpack.c.l.b16 %v1227
      %v1336 = vunpack.c.l.b16 %v1228
      %v1337 = vunpack.c.l.b16 %v1229
      %v1338 = vunpack.c.l.b16 %v1230
      %v1339 = vunpack.c.l.b16 %v1231
      %v1340 = vunpack.c.l.b16 %v1232
      %v1341 = vunpack.c.l.b16 %v1233
      %v1342 = vunpack.c.l.b16 %v1234
      %v1343 = vunpack.c.l.b16 %v1235
      %v1344 = vunpack.c.l.b16 %v1236
      %v1345 = vunpack.c.l.b16 %v1237
      %v1346 = vunpack.c.l.b16 %v1238
      %v1347 = vunpack.c.l.b16 %v1239
      %v1348 = vpack.c.b16 %v1313, %v1312
      %v1349 = vpack.c.b16 %v1315, %v1314
      %v1350 = vpack.c.b16 %v1317, %v1316
      %v1351 = vpack.c.b16 %v1319, %v1318
      %v1352 = vpack.c.b16 %v1321, %v1320
      %v1353 = vpack.c.b16 %v1323, %v1322
      %v1354 = vpack.c.b16 %v1325, %v1324
      %v1355 = vpack.c.b16 %v1327, %v1326
      %v1356 = vpack.c.b16 %v1329, %v1328
      %v1357 = vpack.c.b16 %v1331, %v1330
      %v1358 = vpack.c.b16 %v1333, %v1332
      %v1359 = vpack.c.b16 %v1335, %v1334
      %v1360 = vpack.c.b16 %v1337, %v1336
      %v1361 = vpack.c.b16 %v1339, %v1338
      %v1362 = vpack.c.b16 %v1341, %v1340
      %v1363 = vpack.c.b16 %v1343, %v1342
      %v1364 = vpack.c.b16 %v1345, %v1344
      %v1365 = vpack.c.b16 %v1347, %v1346
      %v1384 = vunpack.c.l.b16 %v1240
      %v1385 = vunpack.c.l.b16 %v1241
      %v1386 = vunpack.c.l.b16 %v1242
      %v1387 = vunpack.c.l.b16 %v1243
      %v1388 = vunpack.c.l.b16 %v1244
      %v1389 = vunpack.c.l.b16 %v1245
      %v1390 = vunpack.c.l.b16 %v1246
      %v1391 = vunpack.c.l.b16 %v1247
      %v1392 = vunpack.c.l.b16 %v1248
      %v1393 = vunpack.c.l.b16 %v1249
      %v1394 = vunpack.c.l.b16 %v1250
      %v1395 = vunpack.c.l.b16 %v1251
      %v1396 = vunpack.c.l.b16 %v1252
      %v1397 = vunpack.c.l.b16 %v1253
      %v1398 = vunpack.c.l.b16 %v1254
      %v1399 = vunpack.c.l.b16 %v1255
      %v1400 = vunpack.c.l.b16 %v1256
      %v1401 = vunpack.c.l.b16 %v1257
      %v1402 = vpack.c.b16 %v1384, %v1384
      %v1403 = vpack.c.b16 %v1385, %v1385
      %v1404 = vpack.c.b16 %v1386, %v1386
      %v1405 = vpack.c.b16 %v1387, %v1387
      %v1406 = vpack.c.b16 %v1388, %v1388
      %v1407 = vpack.c.b16 %v1389, %v1389
      %v1408 = vpack.c.b16 %v1390, %v1390
      %v1409 = vpack.c.b16 %v1391, %v1391
      %v1410 = vpack.c.b16 %v1392, %v1392
      %v1411 = vpack.c.b16 %v1393, %v1393
      %v1412 = vpack.c.b16 %v1394, %v1394
      %v1413 = vpack.c.b16 %v1395, %v1395
      %v1414 = vpack.c.b16 %v1396, %v1396
      %v1415 = vpack.c.b16 %v1397, %v1397
      %v1416 = vpack.c.b16 %v1398, %v1398
      %v1417 = vpack.c.b16 %v1399, %v1399
      %v1418 = vpack.c.b16 %v1400, %v1400
      %v1419 = vpack.c.b16 %v1401, %v1401
      %vm1420 = vsmask.f32 7424
      %v1422 = vshrl.u32 %v1348, 16
      %v1424 = vshll.u32 %v1348, 16
      %v1426 = vrot.slane %v1424, 1
      %v1427 = vor.u32 %v1422, %v1426
      %v1429 = vshll.u32 %v1402, 16
      %v1431 = vrot.slane %v1429, 1
      %v1432 = vsel %vm1420, %v1427, %v1431
      %v1434 = vshrl.u32 %v1349, 16
      %v1436 = vshll.u32 %v1349, 16
      %v1438 = vrot.slane %v1436, 1
      %v1439 = vor.u32 %v1434, %v1438
      %v1441 = vshll.u32 %v1403, 16
      %v1443 = vrot.slane %v1441, 1
      %v1444 = vsel %vm1420, %v1439, %v1443
      %v1446 = vshrl.u32 %v1350, 16
      %v1448 = vshll.u32 %v1350, 16
      %v1450 = vrot.slane %v1448, 1
      %v1451 = vor.u32 %v1446, %v1450
      %v1453 = vshll.u32 %v1404, 16
      %v1455 = vrot.slane %v1453, 1
      %v1456 = vsel %vm1420, %v1451, %v1455
      %v1458 = vshrl.u32 %v1351, 16
      %v1460 = vshll.u32 %v1351, 16
      %v1462 = vrot.slane %v1460, 1
      %v1463 = vor.u32 %v1458, %v1462
      %v1465 = vshll.u32 %v1405, 16
      %v1467 = vrot.slane %v1465, 1
      %v1468 = vsel %vm1420, %v1463, %v1467
      %v1470 = vshrl.u32 %v1352, 16
      %v1472 = vshll.u32 %v1352, 16
      %v1474 = vrot.slane %v1472, 1
      %v1475 = vor.u32 %v1470, %v1474
      %v1477 = vshll.u32 %v1406, 16
      %v1479 = vrot.slane %v1477, 1
      %v1480 = vsel %vm1420, %v1475, %v1479
      %v1482 = vshrl.u32 %v1353, 16
      %v1484 = vshll.u32 %v1353, 16
      %v1486 = vrot.slane %v1484, 1
      %v1487 = vor.u32 %v1482, %v1486
      %v1489 = vshll.u32 %v1407, 16
      %v1491 = vrot.slane %v1489, 1
      %v1492 = vsel %vm1420, %v1487, %v1491
      %v1494 = vshrl.u32 %v1354, 16
      %v1496 = vshll.u32 %v1354, 16
      %v1498 = vrot.slane %v1496, 1
      %v1499 = vor.u32 %v1494, %v1498
      %v1501 = vshll.u32 %v1408, 16
      %v1503 = vrot.slane %v1501, 1
      %v1504 = vsel %vm1420, %v1499, %v1503
      %v1506 = vshrl.u32 %v1355, 16
      %v1508 = vshll.u32 %v1355, 16
      %v1510 = vrot.slane %v1508, 1
      %v1511 = vor.u32 %v1506, %v1510
      %v1513 = vshll.u32 %v1409, 16
      %v1515 = vrot.slane %v1513, 1
      %v1516 = vsel %vm1420, %v1511, %v1515
      %v1518 = vshrl.u32 %v1356, 16
      %v1520 = vshll.u32 %v1356, 16
      %v1522 = vrot.slane %v1520, 1
      %v1523 = vor.u32 %v1518, %v1522
      %v1525 = vshll.u32 %v1410, 16
      %v1527 = vrot.slane %v1525, 1
      %v1528 = vsel %vm1420, %v1523, %v1527
      %v1530 = vshrl.u32 %v1357, 16
      %v1532 = vshll.u32 %v1357, 16
      %v1534 = vrot.slane %v1532, 1
      %v1535 = vor.u32 %v1530, %v1534
      %v1537 = vshll.u32 %v1411, 16
      %v1539 = vrot.slane %v1537, 1
      %v1540 = vsel %vm1420, %v1535, %v1539
      %v1542 = vshrl.u32 %v1358, 16
      %v1544 = vshll.u32 %v1358, 16
      %v1546 = vrot.slane %v1544, 1
      %v1547 = vor.u32 %v1542, %v1546
      %v1549 = vshll.u32 %v1412, 16
      %v1551 = vrot.slane %v1549, 1
      %v1552 = vsel %vm1420, %v1547, %v1551
      %v1554 = vshrl.u32 %v1359, 16
      %v1556 = vshll.u32 %v1359, 16
      %v1558 = vrot.slane %v1556, 1
      %v1559 = vor.u32 %v1554, %v1558
      %v1561 = vshll.u32 %v1413, 16
      %v1563 = vrot.slane %v1561, 1
      %v1564 = vsel %vm1420, %v1559, %v1563
      %v1566 = vshrl.u32 %v1360, 16
      %v1568 = vshll.u32 %v1360, 16
      %v1570 = vrot.slane %v1568, 1
      %v1571 = vor.u32 %v1566, %v1570
      %v1573 = vshll.u32 %v1414, 16
      %v1575 = vrot.slane %v1573, 1
      %v1576 = vsel %vm1420, %v1571, %v1575
      %v1578 = vshrl.u32 %v1361, 16
      %v1580 = vshll.u32 %v1361, 16
      %v1582 = vrot.slane %v1580, 1
      %v1583 = vor.u32 %v1578, %v1582
      %v1585 = vshll.u32 %v1415, 16
      %v1587 = vrot.slane %v1585, 1
      %v1588 = vsel %vm1420, %v1583, %v1587
      %v1590 = vshrl.u32 %v1362, 16
      %v1592 = vshll.u32 %v1362, 16
      %v1594 = vrot.slane %v1592, 1
      %v1595 = vor.u32 %v1590, %v1594
      %v1597 = vshll.u32 %v1416, 16
      %v1599 = vrot.slane %v1597, 1
      %v1600 = vsel %vm1420, %v1595, %v1599
      %v1602 = vshrl.u32 %v1363, 16
      %v1604 = vshll.u32 %v1363, 16
      %v1606 = vrot.slane %v1604, 1
      %v1607 = vor.u32 %v1602, %v1606
      %v1609 = vshll.u32 %v1417, 16
      %v1611 = vrot.slane %v1609, 1
      %v1612 = vsel %vm1420, %v1607, %v1611
      %v1614 = vshrl.u32 %v1364, 16
      %v1616 = vshll.u32 %v1364, 16
      %v1618 = vrot.slane %v1616, 1
      %v1619 = vor.u32 %v1614, %v1618
      %v1621 = vshll.u32 %v1418, 16
      %v1623 = vrot.slane %v1621, 1
      %v1624 = vsel %vm1420, %v1619, %v1623
      %v1626 = vshrl.u32 %v1365, 16
      %v1628 = vshll.u32 %v1365, 16
      %v1630 = vrot.slane %v1628, 1
      %v1631 = vor.u32 %v1626, %v1630
      %v1633 = vshll.u32 %v1419, 16
      %v1635 = vrot.slane %v1633, 1
      %v1636 = vsel %vm1420, %v1631, %v1635
      %1637 = vrot.lane.b32.xlu0 %v1432, 8
      %v1638 = vpop.permute.xlu0 %1637
      %1639 = vrot.lane.b32.xlu0 %v1444, 8
      %v1640 = vpop.permute.xlu0 %1639
      %1641 = vrot.lane.b32.xlu0 %v1456, 8
      %v1642 = vpop.permute.xlu0 %1641
      %1643 = vrot.lane.b32.xlu0 %v1468, 8
      %v1644 = vpop.permute.xlu0 %1643
      %1645 = vrot.lane.b32.xlu0 %v1480, 8
      %v1646 = vpop.permute.xlu0 %1645
      %1647 = vrot.lane.b32.xlu0 %v1492, 8
      %v1648 = vpop.permute.xlu0 %1647
      %1649 = vrot.lane.b32.xlu0 %v1504, 8
      %v1650 = vpop.permute.xlu0 %1649
      %1651 = vrot.lane.b32.xlu0 %v1516, 8
      %v1652 = vpop.permute.xlu0 %1651
      %1653 = vrot.lane.b32.xlu0 %v1528, 8
      %v1654 = vpop.permute.xlu0 %1653
      %1655 = vrot.lane.b32.xlu0 %v1540, 8
      %v1656 = vpop.permute.xlu0 %1655
      %1657 = vrot.lane.b32.xlu0 %v1552, 8
      %v1658 = vpop.permute.xlu0 %1657
      %1659 = vrot.lane.b32.xlu0 %v1564, 8
      %v1660 = vpop.permute.xlu0 %1659
      %1661 = vrot.lane.b32.xlu0 %v1576, 8
      %v1662 = vpop.permute.xlu0 %1661
      %1663 = vrot.lane.b32.xlu0 %v1588, 8
      %v1664 = vpop.permute.xlu0 %1663
      %1665 = vrot.lane.b32.xlu0 %v1600, 8
      %v1666 = vpop.permute.xlu0 %1665
      %1667 = vrot.lane.b32.xlu0 %v1612, 8
      %v1668 = vpop.permute.xlu0 %1667
      %1669 = vrot.lane.b32.xlu0 %v1624, 8
      %v1670 = vpop.permute.xlu0 %1669
      %1671 = vrot.lane.b32.xlu0 %v1636, 8
      %v1672 = vpop.permute.xlu0 %1671
      %v1691 = vunpack.c.l.b16 %v1258
      %v1692 = vunpack.c.l.b16 %v1259
      %v1693 = vunpack.c.l.b16 %v1260
      %v1694 = vunpack.c.l.b16 %v1261
      %v1695 = vunpack.c.l.b16 %v1262
      %v1696 = vunpack.c.l.b16 %v1263
      %v1697 = vunpack.c.l.b16 %v1264
      %v1698 = vunpack.c.l.b16 %v1265
      %v1699 = vunpack.c.l.b16 %v1266
      %v1700 = vunpack.c.l.b16 %v1267
      %v1701 = vunpack.c.l.b16 %v1268
      %v1702 = vunpack.c.l.b16 %v1269
      %v1703 = vunpack.c.l.b16 %v1270
      %v1704 = vunpack.c.l.b16 %v1271
      %v1705 = vunpack.c.l.b16 %v1272
      %v1706 = vunpack.c.l.b16 %v1273
      %v1707 = vunpack.c.l.b16 %v1274
      %v1708 = vunpack.c.l.b16 %v1275
      %v1709 = vpack.c.b16 %v1313, %v1691
      %v1710 = vpack.c.b16 %v1315, %v1692
      %v1711 = vpack.c.b16 %v1317, %v1693
      %v1712 = vpack.c.b16 %v1319, %v1694
      %v1713 = vpack.c.b16 %v1321, %v1695
      %v1714 = vpack.c.b16 %v1323, %v1696
      %v1715 = vpack.c.b16 %v1325, %v1697
      %v1716 = vpack.c.b16 %v1327, %v1698
      %v1717 = vpack.c.b16 %v1329, %v1699
      %v1718 = vpack.c.b16 %v1331, %v1700
      %v1719 = vpack.c.b16 %v1333, %v1701
      %v1720 = vpack.c.b16 %v1335, %v1702
      %v1721 = vpack.c.b16 %v1337, %v1703
      %v1722 = vpack.c.b16 %v1339, %v1704
      %v1723 = vpack.c.b16 %v1341, %v1705
      %v1724 = vpack.c.b16 %v1343, %v1706
      %v1725 = vpack.c.b16 %v1345, %v1707
      %v1726 = vpack.c.b16 %v1347, %v1708
      %vm1727 = vcmask 1046528
      %v1728 = vrot.slane %v1709, 1
      %v1729 = vrot.slane %v1402, 1
      %v1730 = vsel %vm1727, %v1728, %v1729
      %v1731 = vrot.slane %v1710, 1
      %v1732 = vrot.slane %v1403, 1
      %v1733 = vsel %vm1727, %v1731, %v1732
      %v1734 = vrot.slane %v1711, 1
      %v1735 = vrot.slane %v1404, 1
      %v1736 = vsel %vm1727, %v1734, %v1735
      %v1737 = vrot.slane %v1712, 1
      %v1738 = vrot.slane %v1405, 1
      %v1739 = vsel %vm1727, %v1737, %v1738
      %v1740 = vrot.slane %v1713, 1
      %v1741 = vrot.slane %v1406, 1
      %v1742 = vsel %vm1727, %v1740, %v1741
      %v1743 = vrot.slane %v1714, 1
      %v1744 = vrot.slane %v1407, 1
      %v1745 = vsel %vm1727, %v1743, %v1744
      %v1746 = vrot.slane %v1715, 1
      %v1747 = vrot.slane %v1408, 1
      %v1748 = vsel %vm1727, %v1746, %v1747
      %v1749 = vrot.slane %v1716, 1
      %v1750 = vrot.slane %v1409, 1
      %v1751 = vsel %vm1727, %v1749, %v1750
      %v1752 = vrot.slane %v1717, 1
      %v1753 = vrot.slane %v1410, 1
      %v1754 = vsel %vm1727, %v1752, %v1753
      %v1755 = vrot.slane %v1718, 1
      %v1756 = vrot.slane %v1411, 1
      %v1757 = vsel %vm1727, %v1755, %v1756
      %v1758 = vrot.slane %v1719, 1
      %v1759 = vrot.slane %v1412, 1
      %v1760 = vsel %vm1727, %v1758, %v1759
      %v1761 = vrot.slane %v1720, 1
      %v1762 = vrot.slane %v1413, 1
      %v1763 = vsel %vm1727, %v1761, %v1762
      %v1764 = vrot.slane %v1721, 1
      %v1765 = vrot.slane %v1414, 1
      %v1766 = vsel %vm1727, %v1764, %v1765
      %v1767 = vrot.slane %v1722, 1
      %v1768 = vrot.slane %v1415, 1
      %v1769 = vsel %vm1727, %v1767, %v1768
      %v1770 = vrot.slane %v1723, 1
      %v1771 = vrot.slane %v1416, 1
      %v1772 = vsel %vm1727, %v1770, %v1771
      %v1773 = vrot.slane %v1724, 1
      %v1774 = vrot.slane %v1417, 1
      %v1775 = vsel %vm1727, %v1773, %v1774
      %v1776 = vrot.slane %v1725, 1
      %v1777 = vrot.slane %v1418, 1
      %v1778 = vsel %vm1727, %v1776, %v1777
      %v1779 = vrot.slane %v1726, 1
      %v1780 = vrot.slane %v1419, 1
      %v1781 = vsel %vm1727, %v1779, %v1780
      %1782 = vrot.lane.b32.xlu0 %v1730, 16
      %v1783 = vpop.permute.xlu0 %1782
      %1784 = vrot.lane.b32.xlu0 %v1733, 16
      %v1785 = vpop.permute.xlu0 %1784
      %1786 = vrot.lane.b32.xlu0 %v1736, 16
      %v1787 = vpop.permute.xlu0 %1786
      %1788 = vrot.lane.b32.xlu0 %v1739, 16
      %v1789 = vpop.permute.xlu0 %1788
      %1790 = vrot.lane.b32.xlu0 %v1742, 16
      %v1791 = vpop.permute.xlu0 %1790
      %1792 = vrot.lane.b32.xlu0 %v1745, 16
      %v1793 = vpop.permute.xlu0 %1792
      %1794 = vrot.lane.b32.xlu0 %v1748, 16
      %v1795 = vpop.permute.xlu0 %1794
      %1796 = vrot.lane.b32.xlu0 %v1751, 16
      %v1797 = vpop.permute.xlu0 %1796
      %1798 = vrot.lane.b32.xlu0 %v1754, 16
      %v1799 = vpop.permute.xlu0 %1798
      %1800 = vrot.lane.b32.xlu0 %v1757, 16
      %v1801 = vpop.permute.xlu0 %1800
      %1802 = vrot.lane.b32.xlu0 %v1760, 16
      %v1803 = vpop.permute.xlu0 %1802
      %1804 = vrot.lane.b32.xlu0 %v1763, 16
      %v1805 = vpop.permute.xlu0 %1804
      %1806 = vrot.lane.b32.xlu0 %v1766, 16
      %v1807 = vpop.permute.xlu0 %1806
      %1808 = vrot.lane.b32.xlu0 %v1769, 16
      %v1809 = vpop.permute.xlu0 %1808
      %1810 = vrot.lane.b32.xlu0 %v1772, 16
      %v1811 = vpop.permute.xlu0 %1810
      %1812 = vrot.lane.b32.xlu0 %v1775, 16
      %v1813 = vpop.permute.xlu0 %1812
      %1814 = vrot.lane.b32.xlu0 %v1778, 16
      %v1815 = vpop.permute.xlu0 %1814
      %1816 = vrot.lane.b32.xlu0 %v1781, 16
      %v1817 = vpop.permute.xlu0 %1816
      %vm1818 = vcmask 64512
      %v1820 = vsel %vm1818, %v1348, %v1638
      %v1822 = vsel %vm1818, %v1349, %v1640
      %v1824 = vsel %vm1818, %v1350, %v1642
      %v1826 = vsel %vm1818, %v1351, %v1644
      %v1828 = vsel %vm1818, %v1352, %v1646
      %v1830 = vsel %vm1818, %v1353, %v1648
      %v1832 = vsel %vm1818, %v1354, %v1650
      %v1834 = vsel %vm1818, %v1355, %v1652
      %v1836 = vsel %vm1818, %v1356, %v1654
      %v1838 = vsel %vm1818, %v1357, %v1656
      %v1840 = vsel %vm1818, %v1358, %v1658
      %v1842 = vsel %vm1818, %v1359, %v1660
      %v1844 = vsel %vm1818, %v1360, %v1662
      %v1846 = vsel %vm1818, %v1361, %v1664
      %v1848 = vsel %vm1818, %v1362, %v1666
      %v1850 = vsel %vm1818, %v1363, %v1668
      %v1852 = vsel %vm1818, %v1364, %v1670
      %v1854 = vsel %vm1818, %v1365, %v1672
      %vm1855 = vcmask 130048
      %v1857 = vsel %vm1855, %v1820, %v1783
      %v1859 = vsel %vm1855, %v1822, %v1785
      %v1861 = vsel %vm1855, %v1824, %v1787
      %v1863 = vsel %vm1855, %v1826, %v1789
      %v1865 = vsel %vm1855, %v1828, %v1791
      %v1867 = vsel %vm1855, %v1830, %v1793
      %v1869 = vsel %vm1855, %v1832, %v1795
      %v1871 = vsel %vm1855, %v1834, %v1797
      %v1873 = vsel %vm1855, %v1836, %v1799
      %v1875 = vsel %vm1855, %v1838, %v1801
      %v1877 = vsel %vm1855, %v1840, %v1803
      %v1879 = vsel %vm1855, %v1842, %v1805
      %v1881 = vsel %vm1855, %v1844, %v1807
      %v1883 = vsel %vm1855, %v1846, %v1809
      %v1885 = vsel %vm1855, %v1848, %v1811
      %v1887 = vsel %vm1855, %v1850, %v1813
      %v1889 = vsel %vm1855, %v1852, %v1815
      %v1891 = vsel %vm1855, %v1854, %v1817
      %1908 = vrot.lane.b32.xlu0 %v1859, 24
      %v1909 = vpop.permute.xlu0 %1908
      %1910 = vrot.lane.b32.xlu0 %v1861, 24
      %v1911 = vpop.permute.xlu0 %1910
      %1912 = vrot.lane.b32.xlu0 %v1863, 24
      %v1913 = vpop.permute.xlu0 %1912
      %1914 = vrot.lane.b32.xlu0 %v1865, 24
      %v1915 = vpop.permute.xlu0 %1914
      %1916 = vrot.lane.b32.xlu0 %v1867, 24
      %v1917 = vpop.permute.xlu0 %1916
      %1918 = vrot.lane.b32.xlu0 %v1869, 24
      %v1919 = vpop.permute.xlu0 %1918
      %1920 = vrot.lane.b32.xlu0 %v1871, 24
      %v1921 = vpop.permute.xlu0 %1920
      %1922 = vrot.lane.b32.xlu0 %v1873, 24
      %v1923 = vpop.permute.xlu0 %1922
      %1924 = vrot.lane.b32.xlu0 %v1875, 24
      %v1925 = vpop.permute.xlu0 %1924
      %1926 = vrot.lane.b32.xlu0 %v1877, 24
      %v1927 = vpop.permute.xlu0 %1926
      %1928 = vrot.lane.b32.xlu0 %v1879, 24
      %v1929 = vpop.permute.xlu0 %1928
      %1930 = vrot.lane.b32.xlu0 %v1881, 24
      %v1931 = vpop.permute.xlu0 %1930
      %1932 = vrot.lane.b32.xlu0 %v1883, 24
      %v1933 = vpop.permute.xlu0 %1932
      %1934 = vrot.lane.b32.xlu0 %v1885, 24
      %v1935 = vpop.permute.xlu0 %1934
      %1936 = vrot.lane.b32.xlu0 %v1887, 24
      %v1937 = vpop.permute.xlu0 %1936
      %1938 = vrot.lane.b32.xlu0 %v1889, 24
      %v1939 = vpop.permute.xlu0 %1938
      %1941 = vrot.lane.b32.xlu0 %v1861, 48
      %v1942 = vpop.permute.xlu0 %1941
      %1943 = vrot.lane.b32.xlu0 %v1863, 48
      %v1944 = vpop.permute.xlu0 %1943
      %1945 = vrot.lane.b32.xlu0 %v1865, 48
      %v1946 = vpop.permute.xlu0 %1945
      %1947 = vrot.lane.b32.xlu0 %v1867, 48
      %v1948 = vpop.permute.xlu0 %1947
      %1949 = vrot.lane.b32.xlu0 %v1869, 48
      %v1950 = vpop.permute.xlu0 %1949
      %1951 = vrot.lane.b32.xlu0 %v1871, 48
      %v1952 = vpop.permute.xlu0 %1951
      %1953 = vrot.lane.b32.xlu0 %v1873, 48
      %v1954 = vpop.permute.xlu0 %1953
      %1955 = vrot.lane.b32.xlu0 %v1875, 48
      %v1956 = vpop.permute.xlu0 %1955
      %1957 = vrot.lane.b32.xlu0 %v1877, 48
      %v1958 = vpop.permute.xlu0 %1957
      %1959 = vrot.lane.b32.xlu0 %v1879, 48
      %v1960 = vpop.permute.xlu0 %1959
      %1961 = vrot.lane.b32.xlu0 %v1881, 48
      %v1962 = vpop.permute.xlu0 %1961
      %1963 = vrot.lane.b32.xlu0 %v1883, 48
      %v1964 = vpop.permute.xlu0 %1963
      %1965 = vrot.lane.b32.xlu0 %v1885, 48
      %v1966 = vpop.permute.xlu0 %1965
      %1967 = vrot.lane.b32.xlu0 %v1887, 48
      %v1968 = vpop.permute.xlu0 %1967
      %1969 = vrot.lane.b32.xlu0 %v1889, 48
      %v1970 = vpop.permute.xlu0 %1969
      %1971 = vrot.lane.b32.xlu0 %v1891, 48
      %v1972 = vpop.permute.xlu0 %1971
      %vm1973 = vcmask 195584
      %v1975 = vsel %vm1973, %v1857, %v1909
      %v1977 = vsel %vm1973, %v1859, %v1911
      %v1979 = vsel %vm1973, %v1861, %v1913
      %v1981 = vsel %vm1973, %v1863, %v1915
      %v1983 = vsel %vm1973, %v1865, %v1917
      %v1985 = vsel %vm1973, %v1867, %v1919
      %v1987 = vsel %vm1973, %v1869, %v1921
      %v1989 = vsel %vm1973, %v1871, %v1923
      %v1991 = vsel %vm1973, %v1873, %v1925
      %v1993 = vsel %vm1973, %v1875, %v1927
      %v1995 = vsel %vm1973, %v1877, %v1929
      %v1997 = vsel %vm1973, %v1879, %v1931
      %v1999 = vsel %vm1973, %v1881, %v1933
      %v2001 = vsel %vm1973, %v1883, %v1935
      %v2003 = vsel %vm1973, %v1885, %v1937
      %v2005 = vsel %vm1973, %v1887, %v1939
      %vm2006 = vcmask 392192
      %v2008 = vsel %vm2006, %v1975, %v1942
      %v2010 = vsel %vm2006, %v1977, %v1944
      %v2012 = vsel %vm2006, %v1979, %v1946
      %v2014 = vsel %vm2006, %v1981, %v1948
      %v2016 = vsel %vm2006, %v1983, %v1950
      %v2018 = vsel %vm2006, %v1985, %v1952
      %v2020 = vsel %vm2006, %v1987, %v1954
      %v2022 = vsel %vm2006, %v1989, %v1956
      %v2024 = vsel %vm2006, %v1991, %v1958
      %v2026 = vsel %vm2006, %v1993, %v1960
      %v2028 = vsel %vm2006, %v1995, %v1962
      %v2030 = vsel %vm2006, %v1997, %v1964
      %v2032 = vsel %vm2006, %v1999, %v1966
      %v2034 = vsel %vm2006, %v2001, %v1968
      %v2036 = vsel %vm2006, %v2003, %v1970
      %v2038 = vsel %vm2006, %v2005, %v1972
      %v2039 = vld [vmem:[%s3] sm:$0xf]
      %v2040 = vld [vmem:[%s3 + $0x4] sm:$0xf]
      %v2041 = vld [vmem:[%s3 + $0x8] sm:$0xf]
      %v2042 = vld [vmem:[%s3 + $0xc] sm:$0xf]
      %v2043 = vld [vmem:[%s3 + $0x10] sm:$0xf]
      %v2044 = vld [vmem:[%s3 + $0x14] sm:$0xf]
      %v2045 = vld [vmem:[%s3 + $0x18] sm:$0xf]
      %v2046 = vld [vmem:[%s3 + $0x1c] sm:$0xf]
      %v2047 = vld [vmem:[%s3 + $0x20] sm:$0xf]
      %v2048 = vld [vmem:[%s4] sm:$0x1]
      %v2050 = vlaneseq
      %v2051 = vshrl.u32 %v2050, 7
      %v2052 = vsub.s32 0, %v2051
      %v2053 = vrot.slane %v2048, %v2052
      %v2064 = vunpack.c.l.b16 %v2039
      %v2065 = vunpack.c.l.b16 %v2040
      %v2066 = vunpack.c.l.b16 %v2041
      %v2067 = vunpack.c.l.b16 %v2042
      %v2068 = vunpack.c.l.b16 %v2043
      %v2069 = vunpack.c.l.b16 %v2044
      %v2070 = vunpack.c.l.b16 %v2045
      %v2071 = vunpack.c.l.b16 %v2046
      %v2072 = vunpack.c.l.b16 %v2047
      %v2073 = vpack.c.b16 %v2065, %v2064
      %v2074 = vpack.c.b16 %v2067, %v2066
      %v2075 = vpack.c.b16 %v2069, %v2068
      %v2076 = vpack.c.b16 %v2071, %v2070
      %v2077 = vpack.c.b16 %v2072, %v2072
      %vm2082 = vcmask 588800
      %v2083 = vsel %vm2082, %v2008, 0
      %v2085 = vsel %vm2082, %v2010, 0
      %v2087 = vsel %vm2082, %v2012, 0
      %v2089 = vsel %vm2082, %v2014, 0
      %v2091 = vsel %vm2082, %v2016, 0
      %v2093 = vsel %vm2082, %v2018, 0
      %v2095 = vsel %vm2082, %v2020, 0
      %v2097 = vsel %vm2082, %v2022, 0
      %v2099 = vsel %vm2082, %v2024, 0
      %v2101 = vsel %vm2082, %v2026, 0
      %v2103 = vsel %vm2082, %v2028, 0
      %v2105 = vsel %vm2082, %v2030, 0
      %v2107 = vsel %vm2082, %v2032, 0
      %v2109 = vsel %vm2082, %v2034, 0
      %v2111 = vsel %vm2082, %v2036, 0
      %v2113 = vsel %vm2082, %v2038, 0
      %vm2115 = vcmask 1043456
      %v2117 = vsel %vm2115, %v2077, 0
      %2119 = vmatprep.subr.bf16.mxu0 0
      %2120 = vmatpush1.bf16.msra.mxu0 %v2073
      %2121 = vmatprep.subr.bf16.mxu0 0
      %2122 = vmatpush1.bf16.msra.mxu0 %v2074
      %2123 = vmatprep.subr.bf16.mxu0 0
      %2124 = vmatpush1.bf16.msra.mxu0 %v2075
      %2125 = vmatprep.subr.bf16.mxu0 0
      %2126 = vmatpush1.bf16.msra.mxu0 %v2076
      %2127 = vmatprep.subr.bf16.mxu0 0
      %2128 = vmatpush1.bf16.msra.mxu0 %v2117
      %2129 = vmatprep.subr.bf16.mxu0 0
      %2130 = vmatpush1.bf16.msra.mxu0 0
      %2131 = vmatprep.subr.bf16.mxu0 0
      %2132 = vmatpush1.bf16.msra.mxu0 0
      %2133 = vmatprep.subr.bf16.mxu0 0
      %2134 = vmatpush1.bf16.msra.mxu0 0
      %2135 = vmatprep.subr.bf16.mxu0 0
      %2136 = vmatpush1.bf16.msra.mxu0 0
      %2137 = vmatprep.subr.bf16.mxu0 0
      %2138 = vmatpush1.bf16.msra.mxu0 0
      %2139 = vmatprep.subr.bf16.mxu0 0
      %2140 = vmatpush1.bf16.msra.mxu0 0
      %2141 = vmatprep.subr.bf16.mxu0 0
      %2142 = vmatpush1.bf16.msra.mxu0 0
      %2143 = vmatprep.subr.bf16.mxu0 0
      %2144 = vmatpush1.bf16.msra.mxu0 0
      %2145 = vmatprep.subr.bf16.mxu0 0
      %2146 = vmatpush1.bf16.msra.mxu0 0
      %2147 = vmatprep.subr.bf16.mxu0 0
      %2148 = vmatpush1.bf16.msra.mxu0 0
      %2149 = vmatprep.subr.bf16.mxu0 0
      %2150 = vmatpush1.bf16.msra.mxu0 0
      %2151 = vmatprep.mubr.bf16.mxu0 0
      %2152 = vmatmul.mubr.bf16.gmra.mrb[0].mxu0 %v2083
      %v2153 = vpop.f32.mrb[0].mxu0
      %v2154 = vadd.f32 %v2053, %v2153
      %v2155 = vpop.f32.mrb[0].mxu0
      %v2156 = vpop.f32.mrb[0].mxu0
      %v2157 = vadd.f32 %v2053, %v2156
      %v2158 = vpop.f32.mrb[0].mxu0
      %2159 = vmatprep.mubr.bf16.mxu0 0
      %2160 = vmatmul.mubr.bf16.gmra.mrb[0].mxu0 %v2085
      %v2161 = vpop.f32.mrb[0].mxu0
      %v2162 = vadd.f32 %v2053, %v2161
      %v2163 = vpop.f32.mrb[0].mxu0
      %v2164 = vpop.f32.mrb[0].mxu0
      %v2165 = vadd.f32 %v2053, %v2164
      %v2166 = vpop.f32.mrb[0].mxu0
      %2167 = vmatprep.mubr.bf16.mxu0 0
      %2168 = vmatmul.mubr.bf16.gmra.mrb[0].mxu0 %v2087
      %v2169 = vpop.f32.mrb[0].mxu0
      %v2170 = vadd.f32 %v2053, %v2169
      %v2171 = vpop.f32.mrb[0].mxu0
      %v2172 = vpop.f32.mrb[0].mxu0
      %v2173 = vadd.f32 %v2053, %v2172
      %v2174 = vpop.f32.mrb[0].mxu0
      %2175 = vmatprep.mubr.bf16.mxu0 0
      %2176 = vmatmul.mubr.bf16.gmra.mrb[0].mxu0 %v2089
      %v2177 = vpop.f32.mrb[0].mxu0
      %v2178 = vadd.f32 %v2053, %v2177
      %v2179 = vpop.f32.mrb[0].mxu0
      %v2180 = vpop.f32.mrb[0].mxu0
      %v2181 = vadd.f32 %v2053, %v2180
      %v2182 = vpop.f32.mrb[0].mxu0
      %2183 = vmatprep.mubr.bf16.mxu0 0
      %2184 = vmatmul.mubr.bf16.gmra.mrb[0].mxu0 %v2091
      %v2185 = vpop.f32.mrb[0].mxu0
      %v2186 = vadd.f32 %v2053, %v2185
      %v2187 = vpop.f32.mrb[0].mxu0
      %v2188 = vpop.f32.mrb[0].mxu0
      %v2189 = vadd.f32 %v2053, %v2188
      %v2190 = vpop.f32.mrb[0].mxu0
      %2191 = vmatprep.mubr.bf16.mxu0 0
      %2192 = vmatmul.mubr.bf16.gmra.mrb[0].mxu0 %v2093
      %v2193 = vpop.f32.mrb[0].mxu0
      %v2194 = vadd.f32 %v2053, %v2193
      %v2195 = vpop.f32.mrb[0].mxu0
      %v2196 = vpop.f32.mrb[0].mxu0
      %v2197 = vadd.f32 %v2053, %v2196
      %v2198 = vpop.f32.mrb[0].mxu0
      %2199 = vmatprep.mubr.bf16.mxu0 0
      %2200 = vmatmul.mubr.bf16.gmra.mrb[0].mxu0 %v2095
      %v2201 = vpop.f32.mrb[0].mxu0
      %v2202 = vadd.f32 %v2053, %v2201
      %v2203 = vpop.f32.mrb[0].mxu0
      %v2204 = vpop.f32.mrb[0].mxu0
      %v2205 = vadd.f32 %v2053, %v2204
      %v2206 = vpop.f32.mrb[0].mxu0
      %2207 = vmatprep.mubr.bf16.mxu0 0
      %2208 = vmatmul.mubr.bf16.gmra.mrb[0].mxu0 %v2097
      %v2209 = vpop.f32.mrb[0].mxu0
      %v2210 = vadd.f32 %v2053, %v2209
      %v2211 = vpop.f32.mrb[0].mxu0
      %v2212 = vpop.f32.mrb[0].mxu0
      %v2213 = vadd.f32 %v2053, %v2212
      %v2214 = vpop.f32.mrb[0].mxu0
      %2215 = vmatprep.mubr.bf16.mxu0 0
      %2216 = vmatmul.mubr.bf16.gmra.mrb[0].mxu0 %v2099
      %v2217 = vpop.f32.mrb[0].mxu0
      %v2218 = vadd.f32 %v2053, %v2217
      %v2219 = vpop.f32.mrb[0].mxu0
      %v2220 = vpop.f32.mrb[0].mxu0
      %v2221 = vadd.f32 %v2053, %v2220
      %v2222 = vpop.f32.mrb[0].mxu0
      %2223 = vmatprep.mubr.bf16.mxu0 0
      %2224 = vmatmul.mubr.bf16.gmra.mrb[0].mxu0 %v2101
      %v2225 = vpop.f32.mrb[0].mxu0
      %v2226 = vadd.f32 %v2053, %v2225
      %v2227 = vpop.f32.mrb[0].mxu0
      %v2228 = vpop.f32.mrb[0].mxu0
      %v2229 = vadd.f32 %v2053, %v2228
      %v2230 = vpop.f32.mrb[0].mxu0
      %2231 = vmatprep.mubr.bf16.mxu0 0
      %2232 = vmatmul.mubr.bf16.gmra.mrb[0].mxu0 %v2103
      %v2233 = vpop.f32.mrb[0].mxu0
      %v2234 = vadd.f32 %v2053, %v2233
      %v2235 = vpop.f32.mrb[0].mxu0
      %v2236 = vpop.f32.mrb[0].mxu0
      %v2237 = vadd.f32 %v2053, %v2236
      %v2238 = vpop.f32.mrb[0].mxu0
      %2239 = vmatprep.mubr.bf16.mxu0 0
      %2240 = vmatmul.mubr.bf16.gmra.mrb[0].mxu0 %v2105
      %v2241 = vpop.f32.mrb[0].mxu0
      %v2242 = vadd.f32 %v2053, %v2241
      %v2243 = vpop.f32.mrb[0].mxu0
      %v2244 = vpop.f32.mrb[0].mxu0
      %v2245 = vadd.f32 %v2053, %v2244
      %v2246 = vpop.f32.mrb[0].mxu0
      %2247 = vmatprep.mubr.bf16.mxu0 0
      %2248 = vmatmul.mubr.bf16.gmra.mrb[0].mxu0 %v2107
      %v2249 = vpop.f32.mrb[0].mxu0
      %v2250 = vadd.f32 %v2053, %v2249
      %v2251 = vpop.f32.mrb[0].mxu0
      %v2252 = vpop.f32.mrb[0].mxu0
      %v2253 = vadd.f32 %v2053, %v2252
      %v2254 = vpop.f32.mrb[0].mxu0
      %2255 = vmatprep.mubr.bf16.mxu0 0
      %2256 = vmatmul.mubr.bf16.gmra.mrb[0].mxu0 %v2109
      %v2257 = vpop.f32.mrb[0].mxu0
      %v2258 = vadd.f32 %v2053, %v2257
      %v2259 = vpop.f32.mrb[0].mxu0
      %v2260 = vpop.f32.mrb[0].mxu0
      %v2261 = vadd.f32 %v2053, %v2260
      %v2262 = vpop.f32.mrb[0].mxu0
      %2263 = vmatprep.mubr.bf16.mxu0 0
      %2264 = vmatmul.mubr.bf16.gmra.mrb[0].mxu0 %v2111
      %v2265 = vpop.f32.mrb[0].mxu0
      %v2266 = vadd.f32 %v2053, %v2265
      %v2267 = vpop.f32.mrb[0].mxu0
      %v2268 = vpop.f32.mrb[0].mxu0
      %v2269 = vadd.f32 %v2053, %v2268
      %v2270 = vpop.f32.mrb[0].mxu0
      %2271 = vmatprep.mubr.bf16.mxu0 0
      %2272 = vmatmul.mubr.bf16.gmra.mrb[0].mxu0 %v2113
      %v2273 = vpop.f32.mrb[0].mxu0
      %v2274 = vadd.f32 %v2053, %v2273
      %v2275 = vpop.f32.mrb[0].mxu0
      %v2276 = vpop.f32.mrb[0].mxu0
      %v2277 = vadd.f32 %v2053, %v2276
      %v2278 = vpop.f32.mrb[0].mxu0
      %2279 = vdwg.mxu0
      %v2280 = vmax.f32 %v2154, 0.0
      %v2281 = vmax.f32 %v2157, 0.0
      %v2282 = vmax.f32 %v2162, 0.0
      %v2283 = vmax.f32 %v2165, 0.0
      %v2284 = vmax.f32 %v2170, 0.0
      %v2285 = vmax.f32 %v2173, 0.0
      %v2286 = vmax.f32 %v2178, 0.0
      %v2287 = vmax.f32 %v2181, 0.0
      %v2288 = vmax.f32 %v2186, 0.0
      %v2289 = vmax.f32 %v2189, 0.0
      %v2290 = vmax.f32 %v2194, 0.0
      %v2291 = vmax.f32 %v2197, 0.0
      %v2292 = vmax.f32 %v2202, 0.0
      %v2293 = vmax.f32 %v2205, 0.0
      %v2294 = vmax.f32 %v2210, 0.0
      %v2295 = vmax.f32 %v2213, 0.0
      %v2296 = vmax.f32 %v2218, 0.0
      %v2297 = vmax.f32 %v2221, 0.0
      %v2298 = vmax.f32 %v2226, 0.0
      %v2299 = vmax.f32 %v2229, 0.0
      %v2300 = vmax.f32 %v2234, 0.0
      %v2301 = vmax.f32 %v2237, 0.0
      %v2302 = vmax.f32 %v2242, 0.0
      %v2303 = vmax.f32 %v2245, 0.0
      %v2304 = vmax.f32 %v2250, 0.0
      %v2305 = vmax.f32 %v2253, 0.0
      %v2306 = vmax.f32 %v2258, 0.0
      %v2307 = vmax.f32 %v2261, 0.0
      %v2308 = vmax.f32 %v2266, 0.0
      %v2309 = vmax.f32 %v2269, 0.0
      %v2310 = vmax.f32 %v2274, 0.0
      %v2311 = vmax.f32 %v2277, 0.0
      %v2312 = vpack.c.bf16 %v2281, %v2280
      %v2313 = vpack.c.bf16 %v2283, %v2282
      %v2314 = vpack.c.bf16 %v2285, %v2284
      %v2315 = vpack.c.bf16 %v2287, %v2286
      %v2316 = vpack.c.bf16 %v2289, %v2288
      %v2317 = vpack.c.bf16 %v2291, %v2290
      %v2318 = vpack.c.bf16 %v2293, %v2292
      %v2319 = vpack.c.bf16 %v2295, %v2294
      %v2320 = vpack.c.bf16 %v2297, %v2296
      %v2321 = vpack.c.bf16 %v2299, %v2298
      %v2322 = vpack.c.bf16 %v2301, %v2300
      %v2323 = vpack.c.bf16 %v2303, %v2302
      %v2324 = vpack.c.bf16 %v2305, %v2304
      %v2325 = vpack.c.bf16 %v2307, %v2306
      %v2326 = vpack.c.bf16 %v2309, %v2308
      %v2327 = vpack.c.bf16 %v2311, %v2310
      %v2344 = vunpack.c.l.b16 %v2312
      %v2345 = vunpack.c.h.b16 %v2312
      %v2346 = vunpack.c.l.b16 %v2313
      %v2347 = vunpack.c.h.b16 %v2313
      %v2348 = vunpack.c.l.b16 %v2314
      %v2349 = vunpack.c.h.b16 %v2314
      %v2350 = vunpack.c.l.b16 %v2315
      %v2351 = vunpack.c.h.b16 %v2315
      %v2352 = vunpack.c.l.b16 %v2316
      %v2353 = vunpack.c.h.b16 %v2316
      %v2354 = vunpack.c.l.b16 %v2317
      %v2355 = vunpack.c.h.b16 %v2317
      %v2356 = vunpack.c.l.b16 %v2318
      %v2357 = vunpack.c.h.b16 %v2318
      %v2358 = vunpack.c.l.b16 %v2319
      %v2359 = vunpack.c.h.b16 %v2319
      %v2360 = vunpack.c.l.b16 %v2320
      %v2361 = vunpack.c.h.b16 %v2320
      %v2362 = vunpack.c.l.b16 %v2321
      %v2363 = vunpack.c.h.b16 %v2321
      %v2364 = vunpack.c.l.b16 %v2322
      %v2365 = vunpack.c.h.b16 %v2322
      %v2366 = vunpack.c.l.b16 %v2323
      %v2367 = vunpack.c.h.b16 %v2323
      %v2368 = vunpack.c.l.b16 %v2324
      %v2369 = vunpack.c.h.b16 %v2324
      %v2370 = vunpack.c.l.b16 %v2325
      %v2371 = vunpack.c.h.b16 %v2325
      %v2372 = vunpack.c.l.b16 %v2326
      %v2373 = vunpack.c.h.b16 %v2326
      %v2374 = vunpack.c.l.b16 %v2327
      %v2375 = vunpack.c.h.b16 %v2327
      %v2376 = vpack.c.b16 %v2344, %v2344
      %v2377 = vpack.c.b16 %v2345, %v2345
      %v2378 = vpack.c.b16 %v2346, %v2346
      %v2379 = vpack.c.b16 %v2347, %v2347
      %v2380 = vpack.c.b16 %v2348, %v2348
      %v2381 = vpack.c.b16 %v2349, %v2349
      %v2382 = vpack.c.b16 %v2350, %v2350
      %v2383 = vpack.c.b16 %v2351, %v2351
      %v2384 = vpack.c.b16 %v2352, %v2352
      %v2385 = vpack.c.b16 %v2353, %v2353
      %v2386 = vpack.c.b16 %v2354, %v2354
      %v2387 = vpack.c.b16 %v2355, %v2355
      %v2388 = vpack.c.b16 %v2356, %v2356
      %v2389 = vpack.c.b16 %v2357, %v2357
      %v2390 = vpack.c.b16 %v2358, %v2358
      %v2391 = vpack.c.b16 %v2359, %v2359
      %v2392 = vpack.c.b16 %v2360, %v2360
      %v2393 = vpack.c.b16 %v2361, %v2361
      %v2394 = vpack.c.b16 %v2362, %v2362
      %v2395 = vpack.c.b16 %v2363, %v2363
      %v2396 = vpack.c.b16 %v2364, %v2364
      %v2397 = vpack.c.b16 %v2365, %v2365
      %v2398 = vpack.c.b16 %v2366, %v2366
      %v2399 = vpack.c.b16 %v2367, %v2367
      %v2400 = vpack.c.b16 %v2368, %v2368
      %v2401 = vpack.c.b16 %v2369, %v2369
      %v2402 = vpack.c.b16 %v2370, %v2370
      %v2403 = vpack.c.b16 %v2371, %v2371
      %v2404 = vpack.c.b16 %v2372, %v2372
      %v2405 = vpack.c.b16 %v2373, %v2373
      %v2406 = vpack.c.b16 %v2374, %v2374
      %v2407 = vpack.c.b16 %v2375, %v2375
      %2440 = vst.msk [vmem:[%s224] sm:$0xf] %vm611, %v2376
      %2441 = vst.msk [vmem:[%s224 + $0x4] sm:$0xf] %vm611, %v2377
      %2442 = vst.msk [vmem:[%s224 + $0x8] sm:$0xf] %vm611, %v2378
      %2443 = vst.msk [vmem:[%s224 + $0xc] sm:$0xf] %vm611, %v2379
      %2444 = vst.msk [vmem:[%s224 + $0x10] sm:$0xf] %vm611, %v2380
      %2445 = vst.msk [vmem:[%s224 + $0x14] sm:$0xf] %vm611, %v2381
      %2446 = vst.msk [vmem:[%s224 + $0x18] sm:$0xf] %vm611, %v2382
      %2447 = vst.msk [vmem:[%s224 + $0x1c] sm:$0xf] %vm611, %v2383
      %2448 = vst.msk [vmem:[%s224 + $0x20] sm:$0xf] %vm611, %v2384
      %2449 = vst.msk [vmem:[%s224 + $0x24] sm:$0xf] %vm611, %v2385
      %2450 = vst.msk [vmem:[%s224 + $0x28] sm:$0xf] %vm611, %v2386
      %2451 = vst.msk [vmem:[%s224 + $0x2c] sm:$0xf] %vm611, %v2387
      %2452 = vst.msk [vmem:[%s224 + $0x30] sm:$0xf] %vm611, %v2388
      %2453 = vst.msk [vmem:[%s224 + $0x34] sm:$0xf] %vm611, %v2389
      %2454 = vst.msk [vmem:[%s224 + $0x38] sm:$0xf] %vm611, %v2390
      %2455 = vst.msk [vmem:[%s224 + $0x3c] sm:$0xf] %vm611, %v2391
      %2456 = vst.msk [vmem:[%s224 + $0x40] sm:$0xf] %vm611, %v2392
      %2457 = vst.msk [vmem:[%s224 + $0x44] sm:$0xf] %vm611, %v2393
      %2458 = vst.msk [vmem:[%s224 + $0x48] sm:$0xf] %vm611, %v2394
      %2459 = vst.msk [vmem:[%s224 + $0x4c] sm:$0xf] %vm611, %v2395
      %2460 = vst.msk [vmem:[%s224 + $0x50] sm:$0xf] %vm611, %v2396
      %2461 = vst.msk [vmem:[%s224 + $0x54] sm:$0xf] %vm611, %v2397
      %2462 = vst.msk [vmem:[%s224 + $0x58] sm:$0xf] %vm611, %v2398
      %2463 = vst.msk [vmem:[%s224 + $0x5c] sm:$0xf] %vm611, %v2399
      %2464 = vst.msk [vmem:[%s224 + $0x60] sm:$0xf] %vm611, %v2400
      %2465 = vst.msk [vmem:[%s224 + $0x64] sm:$0xf] %vm611, %v2401
      %2466 = vst.msk [vmem:[%s224 + $0x68] sm:$0xf] %vm611, %v2402
      %2467 = vst.msk [vmem:[%s224 + $0x6c] sm:$0xf] %vm611, %v2403
      %2468 = vst.msk [vmem:[%s224 + $0x70] sm:$0xf] %vm611, %v2404
      %2469 = vst.msk [vmem:[%s224 + $0x74] sm:$0xf] %vm611, %v2405
      %2470 = vst.msk [vmem:[%s224 + $0x78] sm:$0xf] %vm611, %v2406
      %2471 = vst.msk [vmem:[%s224 + $0x7c] sm:$0xf] %vm611, %v2407
      %p2472 = scmp.lt.s32.totalorder %s16, 1
      %s2473 = scalar_select %p2472, %s16, 1
      %s2474 = smul.addr %s2473, 32
      %s2475 = smul.addr %s2474, 4
      %s2476 = scalar_lea.vmem %s5, %s2475
      // Predicated region
      $region41: #{conv_block_forward.1} parent=39 // pred_check
        %p2477 = pneg %p144
      $region42: #{conv_block_forward.1} parent=39 // pred_check_branch
        %2479 = sbr.rel (%p2477) target = $region44
      $region43: #{conv_block_forward.1} parent=39 // pred_region
        _
      $region44: #{conv_block_forward.1} parent=39 // pred_fallthru
        _
    $region40: #{conv_block_forward.1} parent=5 // pred_fallthru
      _
    %p2480 = scmp.le.s32.totalorder 2, %s11
    // Predicated region
    $region45: #{conv_block_forward.1} parent=5 // pred_check
      %p2481 = pneg %p2480
    $region46: #{conv_block_forward.1} parent=5 // pred_check_branch
      %2483 = sbr.rel (%p2481) target = $region48
    $region47: #{conv_block_forward.1} parent=5 // pred_region
      %s2484 = ssub.s32 %s11, 2
      // Predicated region
      $region49: #{conv_block_forward.1} parent=47 // pred_check
        %p2485 = pneg %p150
      $region50: #{conv_block_forward.1} parent=47 // pred_check_branch
        %2487 = sbr.rel (%p2485) target = $region52
      $region51: #{conv_block_forward.1} parent=47 // pred_region
        %p2488 = scmp.lt.s32.totalorder %s17, 1
        %s2489 = scalar_select %p2488, %s17, 1
        %s2490 = smul.addr %s2489, 32
        %s2491 = smul.addr %s2490, 4
        %s2492 = scalar_lea.vmem %s5, %s2491
      $region52: #{conv_block_forward.1} parent=47 // pred_fallthru
        _
    $region48: #{conv_block_forward.1} parent=5 // pred_fallthru
      _
  $region6: #{conv_block_forward.1} parent=0 // loop_footer
    %s15 = sadd.s32 1, %s11
  $region7: #{conv_block_forward.1} parent=0 // loop_footer_branch
    %10 = sbr.rel target = $region3
  $region8: #{conv_block_forward.1} parent=0 // loop_exit
    _

</llo_original>
